<compile_context>
chip_gen: v6e
topology: v6e:2x2x1
jax: 0.10.0
libtpu: 0.0.40
codegen_flags: <defaults>
</compile_context>

<pallas_src>
import numpy as np
import jax
import jax.numpy as jnp
from jax.experimental import pallas as pl
from jax.experimental.pallas import tpu as pltpu

WEIGHT1 = 1.0
WEIGHT2 = 1.0
HALF_PI = float(np.pi / 2.0)


def _pick_tile_k(D, Hd, budget_bytes=8 * 1024 * 1024):
    """Largest TK (multiple of 128, dividing D) whose double-buffered streamed
    (Hd, 2*TK) bf16 w_out block stays under budget_bytes."""
    best = 128
    tk = 128
    while tk <= D:
        if D % tk == 0 and 2 * (Hd * 2 * tk * 2) <= budget_bytes:
            best = tk
        tk += 128
    return best


def prepare_params(params, *, tile_k=None):
    """One-time (per param update) weight repacking: bf16 MXU operands + fused psi/eps head.
    Hoisted out of the per-call path so the f32->bf16 casts / concatenation do not add
    HBM traffic on every forward call."""
    D, Hd = params["w1"].shape
    TK = _pick_tile_k(D, Hd) if tile_k is None else tile_k
    assert TK % 128 == 0 and D % TK == 0, (D, TK)
    nblk = D // TK
    # Fuse the two (Hd, D) output heads into one (Hd, 2D) matrix arranged so column block i
    # (width 2*TK) is [wpsi[:, blk i] | weps[:, blk i]]; likewise for the bias.
    wpsi = params["wpsi"].astype(jnp.bfloat16).reshape(Hd, nblk, TK)
    weps = params["weps"].astype(jnp.bfloat16).reshape(Hd, nblk, TK)
    w_out = jnp.concatenate([wpsi, weps], axis=-1).reshape(Hd, 2 * D)
    bpsi = params["bpsi"].astype(jnp.float32).reshape(1, nblk, TK)
    beps = params["beps"].astype(jnp.float32).reshape(1, nblk, TK)
    b_out = jnp.concatenate([bpsi, beps], axis=-1).reshape(1, 2 * D)
    return {
        "w1": params["w1"].astype(jnp.bfloat16),   # (D, Hd)  MXU operand, VMEM-resident
        "wt": params["wt"].astype(jnp.float32),    # (1, Hd)
        "b1": params["b1"].astype(jnp.float32),    # (1, Hd)
        "w_out": w_out,                            # (Hd, 2D) bf16, streamed per column block
        "b_out": b_out,                            # (1, 2D)  f32
        "tile_k": TK, "nblk": nblk, "D": D, "Hd": Hd,
    }


def _make_kernel(TK):
    def kernel(t_ref, x0_ref, noise_ref, w1_ref, wt_ref, b1_ref,
               wout_ref, bout_ref, partial_ref):
        i = pl.program_id(0)
        t = t_ref[...]                                                   # (B, 1) f32

        # x_t = cos(pi/2 t)*x0 + sqrt(t)*noise   (== x0 + (cos-1)*x0 + beta*noise)
        cos_t = jnp.cos(HALF_PI * t)
        beta = jnp.sqrt(t)
        x_t = cos_t * x0_ref[...] + beta * noise_ref[...]                # (B, D) f32

        # Synthetic time-conditioned MLP trunk (w1 stays VMEM-resident across blocks).
        h = jnp.dot(x_t.astype(jnp.bfloat16), w1_ref[...],
                    preferred_element_type=jnp.float32)                  # (B, Hd) f32
        h = jnp.maximum(h + t * wt_ref[...] + b1_ref[...], 0.0).astype(jnp.bfloat16)

        # Fused psi/eps head for this column block: one lane-dense (B, 2*TK) MXU matmul.
        out = jnp.dot(h, wout_ref[...],
                      preferred_element_type=jnp.float32) + bout_ref[...]
        psi_theta = out[:, :TK]
        eps_theta = out[:, TK:]

        # Slice the resident full x0/noise refs for this block (no extra DMA inputs).
        off = pl.multiple_of(i * TK, 128)
        x0_blk = x0_ref[:, pl.ds(off, TK)]
        noise_blk = noise_ref[:, pl.ds(off, TK)]

        # psi target folded into the residual at point of use.
        sin_t = jnp.sin(HALF_PI * t)
        resid_psi = (-HALF_PI) * sin_t * x0_blk - psi_theta
        resid_eps = noise_blk - eps_theta

        # Per-block partial sum-of-squared-errors; wrapper sums and divides by B*D.
        partial_ref[0, 0] = (WEIGHT1 * jnp.sum(resid_psi * resid_psi)
                             + WEIGHT2 * jnp.sum(resid_eps * resid_eps))
    return kernel


def d3m_stoint_forward(x_0_nchw, t, noise_nchw, prep):
    B = x_0_nchw.shape[0]
    D, Hd, TK, nblk = prep["D"], prep["Hd"], prep["tile_k"], prep["nblk"]
    assert int(np.prod(x_0_nchw.shape[1:])) == D

    x0 = x_0_nchw.reshape(B, D).astype(jnp.float32)
    noise = noise_nchw.reshape(B, D).astype(jnp.float32)
    t2 = t.reshape(B, 1).astype(jnp.float32)

    kernel = _make_kernel(TK)

    flops = 2 * B * D * Hd * nblk + 2 * B * Hd * (2 * D) + 10 * B * D
    bytes_accessed = (prep["w1"].size * 2 + prep["w_out"].size * 2
                      + prep["b_out"].size * 4
                      + (prep["wt"].size + prep["b1"].size) * 4
                      + (x0.size + noise.size) * 4 + t2.size * 4 + nblk * 4)
    cost = pl.CostEstimate(flops=int(flops),
                           transcendentals=int(3 * B * nblk),
                           bytes_accessed=int(bytes_accessed))

    grid_spec = pltpu.PrefetchScalarGridSpec(
        num_scalar_prefetch=0,
        grid=(nblk,),
        in_specs=[
            pl.BlockSpec((B, 1), lambda i: (0, 0)),          # t
            pl.BlockSpec((B, D), lambda i: (0, 0)),          # x0 full   (resident)
            pl.BlockSpec((B, D), lambda i: (0, 0)),          # noise full (resident)
            pl.BlockSpec((D, Hd), lambda i: (0, 0)),         # w1 bf16   (resident)
            pl.BlockSpec((1, Hd), lambda i: (0, 0)),         # wt
            pl.BlockSpec((1, Hd), lambda i: (0, 0)),         # b1
            pl.BlockSpec((Hd, 2 * TK), lambda i: (0, i)),    # fused output weight block (streamed)
            pl.BlockSpec((1, 2 * TK), lambda i: (0, i)),     # fused output bias block
        ],
        out_specs=pl.BlockSpec((1, 1), lambda i: (0, i),
                               memory_space=pltpu.MemorySpace.SMEM),
    )

    partials = pl.pallas_call(
        kernel,
        out_shape=jax.ShapeDtypeStruct((1, nblk), jnp.float32),
        grid_spec=grid_spec,
        compiler_params=pltpu.CompilerParams(
            dimension_semantics=("parallel",),               # per-block partials -> megacore OK
            vmem_limit_bytes=32 * 1024 * 1024),
        cost_estimate=cost,
    )(t2, x0, noise, prep["w1"], prep["wt"], prep["b1"], prep["w_out"], prep["b_out"])

    return jnp.sum(partials) / float(B * D)


def d3m_stoint_reference(x_0_nchw, t, noise_nchw, params):
    """Pure-JAX reference with the same (bf16-operand, f32-accum) matmul numerics."""
    B = x_0_nchw.shape[0]
    D = int(np.prod(x_0_nchw.shape[1:]))
    x0 = x_0_nchw.reshape(B, D).astype(jnp.float32)
    noise = noise_nchw.reshape(B, D).astype(jnp.float32)
    t2 = t.reshape(B, 1).astype(jnp.float32)
    x_t = jnp.cos(HALF_PI * t2) * x0 + jnp.sqrt(t2) * noise
    h = jnp.dot(x_t.astype(jnp.bfloat16), params["w1"].astype(jnp.bfloat16),
                preferred_element_type=jnp.float32)
    h = jnp.maximum(h + t2 * params["wt"] + params["b1"], 0.0)
    h16 = h.astype(jnp.bfloat16)
    psi_theta = jnp.dot(h16, params["wpsi"].astype(jnp.bfloat16),
                        preferred_element_type=jnp.float32) + params["bpsi"]
    eps_theta = jnp.dot(h16, params["weps"].astype(jnp.bfloat16),
                        preferred_element_type=jnp.float32) + params["beps"]
    psi_target = (-HALF_PI) * jnp.sin(HALF_PI * t2) * x0
    return (WEIGHT1 * jnp.mean((psi_target - psi_theta) ** 2)
            + WEIGHT2 * jnp.mean((noise - eps_theta) ** 2))


def init_params(key, D, Hd):
    k1, k2, k3, k4 = jax.random.split(key, 4)
    return {
        "w1":   jax.random.normal(k1, (D, Hd), jnp.float32) / np.sqrt(D),
        "b1":   jnp.zeros((1, Hd), jnp.float32),
        "wt":   0.1 * jax.random.normal(k2, (1, Hd), jnp.float32),
        "wpsi": jax.random.normal(k3, (Hd, D), jnp.float32) / np.sqrt(Hd),
        "bpsi": jnp.zeros((1, D), jnp.float32),
        "weps": jax.random.normal(k4, (Hd, D), jnp.float32) / np.sqrt(Hd),
        "beps": jnp.zeros((1, D), jnp.float32),
    }


if __name__ == "__main__":
    key = jax.random.PRNGKey(0)
    kx, kn, kt, kp = jax.random.split(key, 4)

    B, C, H, W = 2, 4, 16, 16          # NCHW, like the PyTorch module
    D = C * H * W                      # 1024
    Hd = 256                           # synthetic net hidden width

    x0 = jax.random.normal(kx, (B, C, H, W), jnp.float32)
    noise = jax.random.normal(kn, (B, C, H, W), jnp.float32)   # torch.randn_like(x_0)
    t = jax.random.uniform(kt, (B,), jnp.float32)              # torch.rand((B,))
    params = init_params(kp, D, Hd)

    # Weight repacking done once (would be re-done only on parameter updates).
    prep = jax.tree_util.tree_map(
        lambda a: jax.block_until_ready(a) if isinstance(a, jax.Array) else a,
        prepare_params(params))

    loss = d3m_stoint_forward(x0, t, noise, prep)
    loss = jax.block_until_ready(loss)

    ref = d3m_stoint_reference(x0, t, noise, params)
    assert np.isfinite(float(loss))
    assert np.allclose(float(loss), float(ref), rtol=1e-2, atol=1e-2), (loss, ref)

    print("KERNEL_OK")
</pallas_src>

<mosaic_0001>
module attributes {stable_mosaic.version = 11 : i64} {
  func.func @kernel(%arg0: i32, %arg1: memref<2x1xf32, #tpu.memory_space<vmem>>, %arg2: memref<2x1024xf32, #tpu.memory_space<vmem>>, %arg3: memref<2x1024xf32, #tpu.memory_space<vmem>>, %arg4: memref<1024x256xbf16, #tpu.memory_space<vmem>>, %arg5: memref<1x256xf32, #tpu.memory_space<vmem>>, %arg6: memref<1x256xf32, #tpu.memory_space<vmem>>, %arg7: memref<256x2048xbf16, #tpu.memory_space<vmem>>, %arg8: memref<1x2048xf32, #tpu.memory_space<vmem>>, %arg9: memref<1x1xf32, #tpu.memory_space<smem>>) attributes {dimension_semantics = [#tpu.dimension_semantics<parallel>], iteration_bounds = array<i64: 1>, scalar_prefetch = 0 : i64, scratch_operands = 0 : i64, tpu.core_type = #tpu.core_type<tc>, window_params = [{pipeline_mode = #tpu.pipeline_mode<synchronous>, transform_indices = @transform_0, window_bounds = array<i64: 2, 1>}, {pipeline_mode = #tpu.pipeline_mode<synchronous>, transform_indices = @transform_1, window_bounds = array<i64: 2, 1024>}, {pipeline_mode = #tpu.pipeline_mode<synchronous>, transform_indices = @transform_2, window_bounds = array<i64: 2, 1024>}, {pipeline_mode = #tpu.pipeline_mode<synchronous>, transform_indices = @transform_3, window_bounds = array<i64: 1024, 256>}, {pipeline_mode = #tpu.pipeline_mode<synchronous>, transform_indices = @transform_4, window_bounds = array<i64: 1, 256>}, {pipeline_mode = #tpu.pipeline_mode<synchronous>, transform_indices = @transform_5, window_bounds = array<i64: 1, 256>}, {transform_indices = @transform_6, window_bounds = array<i64: 256, 2048>}, {transform_indices = @transform_7, window_bounds = array<i64: 1, 2048>}, {transform_indices = @transform_8, window_bounds = array<i64: 1, 1>}]} {
    %c0 = arith.constant 0 : index
    %c0_0 = arith.constant 0 : index
    %0 = vector.load %arg1[%c0, %c0_0] : memref<2x1xf32, #tpu.memory_space<vmem>>, vector<2x1xf32>
    %cst = arith.constant 1.57079637 : f32
    %1 = vector.broadcast %cst : f32 to vector<2x1xf32>
    %2 = arith.mulf %1, %0 : vector<2x1xf32>
    %3 = math.cos %2 : vector<2x1xf32>
    %4 = math.sqrt %0 : vector<2x1xf32>
    %c0_1 = arith.constant 0 : index
    %c0_2 = arith.constant 0 : index
    %5 = vector.load %arg2[%c0_1, %c0_2] : memref<2x1024xf32, #tpu.memory_space<vmem>>, vector<2x1024xf32>
    %6 = vector.broadcast %3 : vector<2x1xf32> to vector<2x1024xf32>
    %7 = arith.mulf %6, %5 : vector<2x1024xf32>
    %c0_3 = arith.constant 0 : index
    %c0_4 = arith.constant 0 : index
    %8 = vector.load %arg3[%c0_3, %c0_4] : memref<2x1024xf32, #tpu.memory_space<vmem>>, vector<2x1024xf32>
    %9 = vector.broadcast %4 : vector<2x1xf32> to vector<2x1024xf32>
    %10 = arith.mulf %9, %8 : vector<2x1024xf32>
    %11 = arith.addf %7, %10 : vector<2x1024xf32>
    %12 = arith.truncf %11 : vector<2x1024xf32> to vector<2x1024xbf16>
    %c0_5 = arith.constant 0 : index
    %c0_6 = arith.constant 0 : index
    %13 = vector.load %arg4[%c0_5, %c0_6] : memref<1024x256xbf16, #tpu.memory_space<vmem>>, vector<1024x256xbf16>
    %cst_7 = arith.constant dense<0.000000e+00> : vector<2x256xf32>
    %14 = tpu.matmul %12, %13, %cst_7 {dimension_numbers = #tpu.dot_dimension_numbers<[1], [0], [0], [1], [0, 0, 1, 1], [], []>} : vector<2x1024xbf16>, vector<1024x256xbf16>, vector<2x256xf32> -> vector<2x256xf32>
    %c0_8 = arith.constant 0 : index
    %c0_9 = arith.constant 0 : index
    %15 = vector.load %arg5[%c0_8, %c0_9] : memref<1x256xf32, #tpu.memory_space<vmem>>, vector<1x256xf32>
    %16 = vector.broadcast %0 : vector<2x1xf32> to vector<2x256xf32>
    %17 = vector.broadcast %15 : vector<1x256xf32> to vector<2x256xf32>
    %18 = arith.mulf %16, %17 : vector<2x256xf32>
    %19 = arith.addf %14, %18 : vector<2x256xf32>
    %c0_10 = arith.constant 0 : index
    %c0_11 = arith.constant 0 : index
    %20 = vector.load %arg6[%c0_10, %c0_11] : memref<1x256xf32, #tpu.memory_space<vmem>>, vector<1x256xf32>
    %21 = vector.broadcast %20 : vector<1x256xf32> to vector<2x256xf32>
    %22 = arith.addf %19, %21 : vector<2x256xf32>
    %cst_12 = arith.constant 0.000000e+00 : f32
    %23 = vector.broadcast %cst_12 : f32 to vector<2x256xf32>
    %24 = arith.maximumf %22, %23 : vector<2x256xf32>
    %25 = arith.truncf %24 : vector<2x256xf32> to vector<2x256xbf16>
    %c0_13 = arith.constant 0 : index
    %c0_14 = arith.constant 0 : index
    %26 = vector.load %arg7[%c0_13, %c0_14] : memref<256x2048xbf16, #tpu.memory_space<vmem>>, vector<256x2048xbf16>
    %cst_15 = arith.constant dense<0.000000e+00> : vector<2x2048xf32>
    %27 = tpu.matmul %25, %26, %cst_15 {dimension_numbers = #tpu.dot_dimension_numbers<[1], [0], [0], [1], [0, 0, 1, 1], [], []>} : vector<2x256xbf16>, vector<256x2048xbf16>, vector<2x2048xf32> -> vector<2x2048xf32>
    %c0_16 = arith.constant 0 : index
    %c0_17 = arith.constant 0 : index
    %28 = vector.load %arg8[%c0_16, %c0_17] : memref<1x2048xf32, #tpu.memory_space<vmem>>, vector<1x2048xf32>
    %29 = vector.broadcast %28 : vector<1x2048xf32> to vector<2x2048xf32>
    %30 = arith.addf %27, %29 : vector<2x2048xf32>
    %31 = vector.extract_strided_slice %30 {offsets = [0, 0], sizes = [2, 1024], strides = [1, 1]} : vector<2x2048xf32> to vector<2x1024xf32>
    %32 = vector.extract_strided_slice %30 {offsets = [0, 1024], sizes = [2, 1024], strides = [1, 1]} : vector<2x2048xf32> to vector<2x1024xf32>
    %c1024_i32 = arith.constant 1024 : i32
    %33 = arith.muli %arg0, %c1024_i32 : i32
    %34 = tpu.assume_multiple %33, 128 : i32
    %c0_18 = arith.constant 0 : index
    %35 = arith.index_cast %34 : i32 to index
    %36 = vector.load %arg2[%c0_18, %35] : memref<2x1024xf32, #tpu.memory_space<vmem>>, vector<2x1024xf32>
    %c0_19 = arith.constant 0 : index
    %37 = arith.index_cast %34 : i32 to index
    %38 = vector.load %arg3[%c0_19, %37] : memref<2x1024xf32, #tpu.memory_space<vmem>>, vector<2x1024xf32>
    %cst_20 = arith.constant 1.57079637 : f32
    %39 = vector.broadcast %cst_20 : f32 to vector<2x1xf32>
    %40 = arith.mulf %39, %0 : vector<2x1xf32>
    %41 = math.sin %40 : vector<2x1xf32>
    %cst_21 = arith.constant -1.57079637 : f32
    %42 = vector.broadcast %cst_21 : f32 to vector<2x1xf32>
    %43 = arith.mulf %42, %41 : vector<2x1xf32>
    %44 = vector.broadcast %43 : vector<2x1xf32> to vector<2x1024xf32>
    %45 = arith.mulf %44, %36 : vector<2x1024xf32>
    %46 = arith.subf %45, %31 : vector<2x1024xf32>
    %47 = arith.subf %38, %32 : vector<2x1024xf32>
    %48 = arith.mulf %46, %46 : vector<2x1024xf32>
    %49 = vector.shape_cast %48 : vector<2x1024xf32> to vector<1x2x1024xf32>
    %cst_22 = arith.constant dense<0.000000e+00> : vector<1xf32>
    %50 = vector.multi_reduction <add>, %49, %cst_22 [1, 2] : vector<1x2x1024xf32> to vector<1xf32>
    %51 = vector.shape_cast %50 : vector<1xf32> to vector<1x1x1xf32>
    %52 = vector.extract %51[0, 0, 0] : f32 from vector<1x1x1xf32>
    %cst_23 = arith.constant 1.000000e+00 : f32
    %53 = arith.mulf %cst_23, %52 : f32
    %54 = arith.mulf %47, %47 : vector<2x1024xf32>
    %55 = vector.shape_cast %54 : vector<2x1024xf32> to vector<1x2x1024xf32>
    %cst_24 = arith.constant dense<0.000000e+00> : vector<1xf32>
    %56 = vector.multi_reduction <add>, %55, %cst_24 [1, 2] : vector<1x2x1024xf32> to vector<1xf32>
    %57 = vector.shape_cast %56 : vector<1xf32> to vector<1x1x1xf32>
    %58 = vector.extract %57[0, 0, 0] : f32 from vector<1x1x1xf32>
    %cst_25 = arith.constant 1.000000e+00 : f32
    %59 = arith.mulf %cst_25, %58 : f32
    %60 = arith.addf %53, %59 : f32
    %c0_26 = arith.constant 0 : index
    %c0_27 = arith.constant 0 : index
    %61 = memref.load %arg9[%c0_26, %c0_27] : memref<1x1xf32, #tpu.memory_space<smem>>
    memref.store %60, %arg9[%c0_26, %c0_27] : memref<1x1xf32, #tpu.memory_space<smem>>
    return
  }
  func.func @transform_0(%arg0: i32) -> (i32, i32) {
    %c0_i32 = arith.constant 0 : i32
    %c0_i32_0 = arith.constant 0 : i32
    %c0_i32_1 = arith.constant 0 : i32
    return %c0_i32, %c0_i32_0 : i32, i32
  }
  func.func @transform_1(%arg0: i32) -> (i32, i32) {
    %c0_i32 = arith.constant 0 : i32
    %c0_i32_0 = arith.constant 0 : i32
    %c0_i32_1 = arith.constant 0 : i32
    return %c0_i32, %c0_i32_0 : i32, i32
  }
  func.func @transform_2(%arg0: i32) -> (i32, i32) {
    %c0_i32 = arith.constant 0 : i32
    %c0_i32_0 = arith.constant 0 : i32
    %c0_i32_1 = arith.constant 0 : i32
    return %c0_i32, %c0_i32_0 : i32, i32
  }
  func.func @transform_3(%arg0: i32) -> (i32, i32) {
    %c0_i32 = arith.constant 0 : i32
    %c0_i32_0 = arith.constant 0 : i32
    %c0_i32_1 = arith.constant 0 : i32
    return %c0_i32, %c0_i32_0 : i32, i32
  }
  func.func @transform_4(%arg0: i32) -> (i32, i32) {
    %c0_i32 = arith.constant 0 : i32
    %c0_i32_0 = arith.constant 0 : i32
    %c0_i32_1 = arith.constant 0 : i32
    return %c0_i32, %c0_i32_0 : i32, i32
  }
  func.func @transform_5(%arg0: i32) -> (i32, i32) {
    %c0_i32 = arith.constant 0 : i32
    %c0_i32_0 = arith.constant 0 : i32
    %c0_i32_1 = arith.constant 0 : i32
    return %c0_i32, %c0_i32_0 : i32, i32
  }
  func.func @transform_6(%arg0: i32) -> (i32, i32) {
    %c0_i32 = arith.constant 0 : i32
    %c0_i32_0 = arith.constant 0 : i32
    return %c0_i32, %arg0 : i32, i32
  }
  func.func @transform_7(%arg0: i32) -> (i32, i32) {
    %c0_i32 = arith.constant 0 : i32
    %c0_i32_0 = arith.constant 0 : i32
    return %c0_i32, %arg0 : i32, i32
  }
  func.func @transform_8(%arg0: i32) -> (i32, i32) {
    %c0_i32 = arith.constant 0 : i32
    %c0_i32_0 = arith.constant 0 : i32
    return %c0_i32, %arg0 : i32, i32
  }
}

</mosaic_0001>

<llo_original>
// kernel: tpu_custom_call.1
$region0: #{tpu_custom_call.1}
  #allocation0 [shape = 'u32[]', space=smem, size = 0x4, offset = 0x4, fixed_abs, tag = 'smem constant byte address 0x4 - core index']
  #allocation1 [shape = 'u32[144,128]{1,0:T(1,128)}', space=vmem, size = 0x12000, scoped, tag = 'internal scratch']
  %s0 = inlined_call_operand.vmem [shape: f32[2,1], index: 0, kind: input, shape index: {}]
  %s1 = inlined_call_operand.hbm [shape: f32[2,1024], index: 1, kind: input, shape index: {}]
  %s2 = inlined_call_operand.hbm [shape: f32[2,1024], index: 2, kind: input, shape index: {}]
  %s3 = inlined_call_operand.hbm [shape: bf16[1024,256], index: 3, kind: input, shape index: {}]
  %s4 = inlined_call_operand.vmem [shape: f32[1,256], index: 4, kind: input, shape index: {}]
  %s5 = inlined_call_operand.vmem [shape: f32[1,256], index: 5, kind: input, shape index: {}]
  %s6 = inlined_call_operand.hbm [shape: bf16[256,2048], index: 6, kind: input, shape index: {}]
  %s7 = inlined_call_operand.hbm [shape: f32[1,2048], index: 7, kind: input, shape index: {}]
  %s8 = inlined_call_operand.hbm [shape: f32[1,1], index: 8, kind: output, shape index: {}]
  %s9 = sld [smem:[#allocation0]]
  $region62: #{tpu_custom_call.1} parent=0
    _
  %s11 = ssub.s32 1, %s9
  %s12 = scalar_select 0, %s11, %s9
  $region1: #{tpu_custom_call.1} parent=0
    #allocation2 [shape = 'u8[8192]{0}', space=vmem, size = 0x2000, scoped, tag = 'input window, operand 1, single buffered']
    #allocation3 [shape = 's32[1]{0}', space=sflag, size = 0x4, scoped, tag = 'scoped memory for tpu_custom_call.1']
    #allocation4 [shape = 's32[1]{0}', space=sflag, size = 0x4, scoped, tag = 'scoped memory for tpu_custom_call.1']
    #allocation5 [shape = 'u8[8192]{0}', space=vmem, size = 0x2000, scoped, tag = 'input window, operand 2, single buffered']
    #allocation6 [shape = 's32[1]{0}', space=sflag, size = 0x4, scoped, tag = 'scoped memory for tpu_custom_call.1']
    #allocation7 [shape = 'u8[524288]{0}', space=vmem, size = 0x80000, scoped, tag = 'input window, operand 3, single buffered']
    #allocation8 [shape = 'u8[1048576]{0}', space=vmem, size = 0x100000, scoped, tag = 'input window, operand 6, single buffered']
    #allocation9 [shape = 's32[1]{0}', space=sflag, size = 0x4, scoped, tag = 'scoped memory for tpu_custom_call.1']
    #allocation10 [shape = 'u8[8192]{0}', space=vmem, size = 0x2000, scoped, tag = 'input window, operand 7, single buffered']
    #allocation11 [shape = 'u8[512]{0}', space=smem, size = 0x200, scoped, tag = 'output window, operand 0, single buffered']
    %13 = vsyncpa [#allocation3], 0
    %14 = vsyncpa [#allocation6], 0
    %15 = vsyncpa [#allocation9], 0
    %16 = vsyncpa [#allocation4], 0
    // Predicated region
    $region2: #{tpu_custom_call.1} parent=1 // pred_check
      _
    $region3: #{tpu_custom_call.1} parent=1 // pred_check_branch
      %18 = sbr.rel (0) target = $region5
    $region4: #{tpu_custom_call.1} parent=1 // pred_region
      _
    $region5: #{tpu_custom_call.1} parent=1 // pred_fallthru
      _
    // Predicated region
    $region6: #{tpu_custom_call.1} parent=1 // pred_check
      _
    $region7: #{tpu_custom_call.1} parent=1 // pred_check_branch
      %20 = sbr.rel (0) target = $region9
    $region8: #{tpu_custom_call.1} parent=1 // pred_region
      %s22 = ssub.s32 256, 256
      %23 = vsyncadd [#allocation3], %s22
      %s25 = sshll.u32 [#allocation2], 4
      %s26 = int_to_ptr.vmem [resolvable:$true] %s25
      %28 = dma.hbm_to_vmem [thread:$0]  %s1, 256, %s26, [#allocation3]
    $region9: #{tpu_custom_call.1} parent=1 // pred_fallthru
      _
    // Predicated region
    $region10: #{tpu_custom_call.1} parent=1 // pred_check
      _
    $region11: #{tpu_custom_call.1} parent=1 // pred_check_branch
      %30 = sbr.rel (0) target = $region13
    $region12: #{tpu_custom_call.1} parent=1 // pred_region
      %s32 = ssub.s32 256, 256
      %33 = vsyncadd [#allocation6], %s32
      %s35 = sshll.u32 [#allocation5], 4
      %s36 = int_to_ptr.vmem [resolvable:$true] %s35
      %38 = dma.hbm_to_vmem [thread:$0]  %s2, 256, %s36, [#allocation6]
    $region13: #{tpu_custom_call.1} parent=1 // pred_fallthru
      _
    // Predicated region
    $region14: #{tpu_custom_call.1} parent=1 // pred_check
      _
    $region15: #{tpu_custom_call.1} parent=1 // pred_check_branch
      %40 = sbr.rel (0) target = $region17
    $region16: #{tpu_custom_call.1} parent=1 // pred_region
      %s42 = ssub.s32 16384, 16384
      %43 = vsyncadd [#allocation6], %s42
      %s44 = sshll.u32 [#allocation7], 4
      %s45 = int_to_ptr.vmem [resolvable:$true] %s44
      %50 = dma.hbm_to_vmem [thread:$0]  %s3, 16384, %s45, [#allocation6], 128, 128, 8
    $region17: #{tpu_custom_call.1} parent=1 // pred_fallthru
      _
    // Predicated region
    $region18: #{tpu_custom_call.1} parent=1 // pred_check
      _
    $region19: #{tpu_custom_call.1} parent=1 // pred_check_branch
      %52 = sbr.rel (0) target = $region21
    $region20: #{tpu_custom_call.1} parent=1 // pred_region
      _
    $region21: #{tpu_custom_call.1} parent=1 // pred_fallthru
      _
    // Predicated region
    $region22: #{tpu_custom_call.1} parent=1 // pred_check
      _
    $region23: #{tpu_custom_call.1} parent=1 // pred_check_branch
      %54 = sbr.rel (0) target = $region25
    $region24: #{tpu_custom_call.1} parent=1 // pred_region
      _
    $region25: #{tpu_custom_call.1} parent=1 // pred_fallthru
      _
    // Predicated region
    $region26: #{tpu_custom_call.1} parent=1 // pred_check
      _
    $region27: #{tpu_custom_call.1} parent=1 // pred_check_branch
      %56 = sbr.rel (0) target = $region29
    $region28: #{tpu_custom_call.1} parent=1 // pred_region
      %s58 = ssub.s32 32768, 32768
      %59 = vsyncadd [#allocation9], %s58
      %s60 = sshll.u32 [#allocation8], 4
      %s61 = int_to_ptr.vmem [resolvable:$true] %s60
      %66 = dma.hbm_to_vmem [thread:$0]  %s6, 32768, %s61, [#allocation9], 1024, 1024, 64
    $region29: #{tpu_custom_call.1} parent=1 // pred_fallthru
      _
    // Predicated region
    $region30: #{tpu_custom_call.1} parent=1 // pred_check
      _
    $region31: #{tpu_custom_call.1} parent=1 // pred_check_branch
      %68 = sbr.rel (0) target = $region33
    $region32: #{tpu_custom_call.1} parent=1 // pred_region
      %s70 = ssub.s32 256, 256
      %71 = vsyncadd [#allocation9], %s70
      %s73 = sshll.u32 [#allocation10], 4
      %s74 = int_to_ptr.vmem [resolvable:$true] %s73
      %76 = dma.hbm_to_vmem [thread:$0]  %s7, 256, %s74, [#allocation9]
    $region33: #{tpu_custom_call.1} parent=1 // pred_fallthru
      _
    // Predicated region
    $region34: #{tpu_custom_call.1} parent=1 // pred_check
      _
    $region35: #{tpu_custom_call.1} parent=1 // pred_check_branch
      %78 = sbr.rel (0) target = $region37
    $region36: #{tpu_custom_call.1} parent=1 // pred_region
      %79 = dma.done [#allocation3], 256
    $region37: #{tpu_custom_call.1} parent=1 // pred_fallthru
      _
    // Predicated region
    $region38: #{tpu_custom_call.1} parent=1 // pred_check
      _
    $region39: #{tpu_custom_call.1} parent=1 // pred_check_branch
      %81 = sbr.rel (0) target = $region41
    $region40: #{tpu_custom_call.1} parent=1 // pred_region
      %82 = dma.done [#allocation6], 256
    $region41: #{tpu_custom_call.1} parent=1 // pred_fallthru
      _
    // Predicated region
    $region42: #{tpu_custom_call.1} parent=1 // pred_check
      _
    $region43: #{tpu_custom_call.1} parent=1 // pred_check_branch
      %84 = sbr.rel (0) target = $region45
    $region44: #{tpu_custom_call.1} parent=1 // pred_region
      %85 = dma.done [#allocation6], 16384
    $region45: #{tpu_custom_call.1} parent=1 // pred_fallthru
      _
    // Predicated region
    $region46: #{tpu_custom_call.1} parent=1 // pred_check
      _
    $region47: #{tpu_custom_call.1} parent=1 // pred_check_branch
      %87 = sbr.rel (0) target = $region49
    $region48: #{tpu_custom_call.1} parent=1 // pred_region
      %88 = dma.done [#allocation9], 32768
    $region49: #{tpu_custom_call.1} parent=1 // pred_fallthru
      _
    // Predicated region
    $region50: #{tpu_custom_call.1} parent=1 // pred_check
      _
    $region51: #{tpu_custom_call.1} parent=1 // pred_check_branch
      %90 = sbr.rel (0) target = $region53
    $region52: #{tpu_custom_call.1} parent=1 // pred_region
      %91 = dma.done [#allocation9], 256
    $region53: #{tpu_custom_call.1} parent=1 // pred_fallthru
      _
    %v92 = vld [vmem:[%s0] sm:$0x3]
    %v93 = vmul.f32 %v92, 1.5707964
    %v94 = vand.u32 2147483647, %v93
    %vm95 = vcmp.le.f32.partialorder %v94, 0.7853982
    %vm96 = vcmp.lt.s32.totalorder %v93, 0
    %v97 = vand.u32 %v93, 2139095040
    %v98 = vshrl.u32 %v97, 23
    %v99 = vsub.s32 %v98, 127
    %v100 = vand.u32 2147483647, %v93
    %v101 = vand.u32 %v100, 8388607
    %v102 = vor.u32 %v101, 8388608
    %v103 = vsub.s32 0, %v102
    %v104 = vadd.s32 %v99, 1
    %vm105 = vcmp.gt.s32.totalorder %v104, 0
    %v106 = vsel %vm105, %v104, 0
    %v107 = vshrl.u32 %v106, 5
    %v108 = vand.u32 %v106, 31
    %v109 = vsub.s32 32, %v108
    %v110 = vshrl.u32 683565275, %v109
    %v111 = vshll.u32 683565275, %v108
    %v112 = vshrl.u32 2475754826, %v109
    %v113 = vor.u32 %v111, %v112
    %v114 = vshll.u32 2475754826, %v108
    %v115 = vshrl.u32 2131351028, %v109
    %v116 = vor.u32 %v114, %v115
    %v117 = vshll.u32 2131351028, %v108
    %v118 = vshrl.u32 2102212464, %v109
    %v119 = vor.u32 %v117, %v118
    %v120 = vshll.u32 2102212464, %v108
    %v121 = vshrl.u32 920167782, %v109
    %v122 = vor.u32 %v120, %v121
    %v123 = vshll.u32 920167782, %v108
    %v124 = vshrl.u32 1326507024, %v109
    %v125 = vor.u32 %v123, %v124
    %vm126 = vcmp.lt.s32.totalorder %v107, 1
    %vm127 = vcmp.lt.s32.totalorder %v107, 2
    %vm128 = vcmp.lt.s32.totalorder %v107, 3
    %vm129 = vcmp.lt.s32.totalorder %v107, 4
    %v130 = vsel %vm126, %v110, %v113
    %v131 = vsel %vm129, %v119, 2102212464
    %v132 = vsel %vm128, %v116, %v131
    %v133 = vsel %vm127, %v130, %v132
    %v134 = vsel %vm126, %v113, %v116
    %v135 = vsel %vm129, %v122, 920167782
    %v136 = vsel %vm128, %v119, %v135
    %v137 = vsel %vm127, %v134, %v136
    %v138 = vsel %vm126, %v116, %v119
    %v139 = vsel %vm129, %v125, 1326507024
    %v140 = vsel %vm128, %v122, %v139
    %v141 = vsel %vm127, %v138, %v140
    %v142 = vshll.u32 %v102, 8
    %v143 = vmul.u32.u64.compose %v142, %v141
    %v144 = vextract.low.u32 %v143
    %v145 = vextract.high.u32 %v143
    %v146 = vmul.u32.u64.compose %v142, %v137
    %v147 = vextract.low.u32 %v146
    %v148 = vextract.high.u32 %v146
    %v149 = vmul.u32 %v142, %v133
    %v150 = vadd.s32 %v145, %v147
    %vm151 = vc.u32 %v145, %v147
    %v152 = vadd.s32 %v148, 1
    %v153 = vsel %vm151, %v152, %v148
    %v154 = vadd.s32 %v149, %v153
    %v155 = vadd.s32 %v154, 536870912
    %v156 = vshrl.u32 %v155, 30
    %v157 = vshll.u32 %v156, 30
    %v158 = vsub.s32 %v154, %v157
    %vm159 = vcmp.lt.s32.totalorder %v158, 0
    %v160 = vsub.s32 0, %v158
    %v161 = vsel %vm159, %v160, %v158
    %v162 = vclz %v161
    %v163 = vsub.s32 %v162, 2
    %vm164 = vcmp.gt.s32.totalorder 0, %v163
    %v165 = vsel %vm164, 0, %v163
    %v166 = vsub.s32 32, %v165
    %v167 = vshll.u32 %v158, %v165
    %v168 = vshrl.u32 %v150, %v166
    %v169 = vor.u32 %v167, %v168
    %v170 = vsub.s32 4294967266, %v165
    %v171 = vadd.s32 %v170, 127
    %v172 = vshll.u32 %v171, 23
    %v173 = vor.u32 4788187, %v172
    %v174 = vand.u32 2147483647, %v173
    %v176 = vcvt.s32.f32 %v169
    %v177 = vmul.f32 %v176, %v174
    %v178 = vxor.u32 %v177, 2147483648
    %v179 = vsel %vm96, %v178, %v177
    %v180 = vsub.s32 4, %v156
    %v181 = vsel %vm96, %v180, %v156
    %v182 = vsel %vm95, %v93, %v179
    %v183 = vsel %vm95, 0, %v181
    %v184 = vcosq.f32.pop %v182
    %v185 = vsinq.f32.pop %v182
    %vm186 = vweird.f32 %v93
    %v187 = vand.u32 %v183, 3
    %vm188 = vcmp.lt.s32.totalorder %v187, 2
    %vm189 = vcmp.eq.s32.totalorder %v187, 0
    %v190 = vxor.u32 %v185, 2147483648
    %v191 = vsel %vm189, %v184, %v190
    %vm192 = vcmp.eq.s32.totalorder %v187, 2
    %v193 = vxor.u32 %v184, 2147483648
    %v194 = vsel %vm192, %v193, %v185
    %v195 = vsel %vm188, %v191, %v194
    %v196 = vsel %vm186, nan, %v195
    %v197 = vrsqrt.pop %v92
    %v198 = vmul.f32 %v92, %v197
    %vm199 = vcmp.eq.f32.partialorder %v92, inf
    %v200 = vsel %vm199, %v92, %v198
    %vm201 = vcmp.eq.f32.partialorder %v92, 0.0
    %v202 = vand.u32 %v92, 2147483648
    %v203 = vsel %vm201, %v202, %v200
    %v204 = vld [vmem:[#allocation2] sm:$0xff]
    %v205 = vld [vmem:[#allocation2 + $0x8] sm:$0xff]
    %207 = vset.pattern.permute.xlu0 0
    %208 = vperm.xlu0 %207, %v196
    %v209 = vpop.permute.xlu0 %208
    %v213 = vcombine.high %v204, %v204
    %v215 = vunpack.c.l.s4 1983009808
    %v216 = vunpack.c.0.s8 %v215
    %v217 = vlaneseq
    %v218 = vshrl.u32 %v217, 7
    %v219 = vsub.s32 %v216, %v218
    %v220 = vrot.slane %v204, %v219
    %v222 = vunpack.c.l.s4 1983009808
    %v223 = vunpack.c.0.s8 %v222
    %v224 = vlaneseq
    %v225 = vshrl.u32 %v224, 7
    %v226 = vsub.s32 %v223, %v225
    %v227 = vrot.slane %v213, %v226
    %v228 = vcombine.high %v220, %v220
    %v229 = vcombine.high %v227, %v227
    %v230 = vcombine.high %v205, %v205
    %v232 = vunpack.c.l.s4 1983009808
    %v233 = vunpack.c.0.s8 %v232
    %v234 = vlaneseq
    %v235 = vshrl.u32 %v234, 7
    %v236 = vsub.s32 %v233, %v235
    %v237 = vrot.slane %v205, %v236
    %v239 = vunpack.c.l.s4 1983009808
    %v240 = vunpack.c.0.s8 %v239
    %v241 = vlaneseq
    %v242 = vshrl.u32 %v241, 7
    %v243 = vsub.s32 %v240, %v242
    %v244 = vrot.slane %v230, %v243
    %v245 = vcombine.high %v237, %v237
    %v246 = vcombine.high %v244, %v244
    %v255 = vmul.f32 %v209, %v220
    %v256 = vmul.f32 %v209, %v228
    %v257 = vmul.f32 %v209, %v227
    %v258 = vmul.f32 %v209, %v229
    %v259 = vmul.f32 %v209, %v237
    %v260 = vmul.f32 %v209, %v245
    %v261 = vmul.f32 %v209, %v244
    %v262 = vmul.f32 %v209, %v246
    %v263 = vld [vmem:[#allocation5] sm:$0xff]
    %v264 = vld [vmem:[#allocation5 + $0x8] sm:$0xff]
    %266 = vset.pattern.permute.xlu0 0
    %267 = vperm.xlu0 %266, %v203
    %v268 = vpop.permute.xlu0 %267
    %v272 = vcombine.high %v263, %v263
    %v274 = vunpack.c.l.s4 1983009808
    %v275 = vunpack.c.0.s8 %v274
    %v276 = vlaneseq
    %v277 = vshrl.u32 %v276, 7
    %v278 = vsub.s32 %v275, %v277
    %v279 = vrot.slane %v263, %v278
    %v281 = vunpack.c.l.s4 1983009808
    %v282 = vunpack.c.0.s8 %v281
    %v283 = vlaneseq
    %v284 = vshrl.u32 %v283, 7
    %v285 = vsub.s32 %v282, %v284
    %v286 = vrot.slane %v272, %v285
    %v287 = vcombine.high %v279, %v279
    %v288 = vcombine.high %v286, %v286
    %v289 = vcombine.high %v264, %v264
    %v291 = vunpack.c.l.s4 1983009808
    %v292 = vunpack.c.0.s8 %v291
    %v293 = vlaneseq
    %v294 = vshrl.u32 %v293, 7
    %v295 = vsub.s32 %v292, %v294
    %v296 = vrot.slane %v264, %v295
    %v298 = vunpack.c.l.s4 1983009808
    %v299 = vunpack.c.0.s8 %v298
    %v300 = vlaneseq
    %v301 = vshrl.u32 %v300, 7
    %v302 = vsub.s32 %v299, %v301
    %v303 = vrot.slane %v289, %v302
    %v304 = vcombine.high %v296, %v296
    %v305 = vcombine.high %v303, %v303
    %v314 = vmul.f32 %v268, %v279
    %v315 = vmul.f32 %v268, %v287
    %v316 = vmul.f32 %v268, %v286
    %v317 = vmul.f32 %v268, %v288
    %v318 = vmul.f32 %v268, %v296
    %v319 = vmul.f32 %v268, %v304
    %v320 = vmul.f32 %v268, %v303
    %v321 = vmul.f32 %v268, %v305
    %v322 = vadd.f32 %v255, %v314
    %v323 = vadd.f32 %v256, %v315
    %v324 = vadd.f32 %v257, %v316
    %v325 = vadd.f32 %v258, %v317
    %v326 = vadd.f32 %v259, %v318
    %v327 = vadd.f32 %v260, %v319
    %v328 = vadd.f32 %v261, %v320
    %v329 = vadd.f32 %v262, %v321
    %v330 = vpack.c.bf16 %v322, %v322
    %v331 = vpack.c.bf16 %v323, %v323
    %v332 = vpack.c.bf16 %v324, %v324
    %v333 = vpack.c.bf16 %v325, %v325
    %v334 = vpack.c.bf16 %v326, %v326
    %v335 = vpack.c.bf16 %v327, %v327
    %v336 = vpack.c.bf16 %v328, %v328
    %v337 = vpack.c.bf16 %v329, %v329
    %v338 = vld [vmem:[#allocation7] sm:$0xff]
    %v339 = vld [vmem:[#allocation7 + $0x8] sm:$0xff]
    %v340 = vld [vmem:[#allocation7 + $0x10] sm:$0xff]
    %v341 = vld [vmem:[#allocation7 + $0x18] sm:$0xff]
    %v342 = vld [vmem:[#allocation7 + $0x20] sm:$0xff]
    %v343 = vld [vmem:[#allocation7 + $0x28] sm:$0xff]
    %v344 = vld [vmem:[#allocation7 + $0x30] sm:$0xff]
    %v345 = vld [vmem:[#allocation7 + $0x38] sm:$0xff]
    %v346 = vld [vmem:[#allocation7 + $0x40] sm:$0xff]
    %v347 = vld [vmem:[#allocation7 + $0x48] sm:$0xff]
    %v348 = vld [vmem:[#allocation7 + $0x50] sm:$0xff]
    %v349 = vld [vmem:[#allocation7 + $0x58] sm:$0xff]
    %v350 = vld [vmem:[#allocation7 + $0x60] sm:$0xff]
    %v351 = vld [vmem:[#allocation7 + $0x68] sm:$0xff]
    %v352 = vld [vmem:[#allocation7 + $0x70] sm:$0xff]
    %v353 = vld [vmem:[#allocation7 + $0x78] sm:$0xff]
    %v354 = vld [vmem:[#allocation7 + $0x80] sm:$0xff]
    %v355 = vld [vmem:[#allocation7 + $0x88] sm:$0xff]
    %v356 = vld [vmem:[#allocation7 + $0x90] sm:$0xff]
    %v357 = vld [vmem:[#allocation7 + $0x98] sm:$0xff]
    %v358 = vld [vmem:[#allocation7 + $0xa0] sm:$0xff]
    %v359 = vld [vmem:[#allocation7 + $0xa8] sm:$0xff]
    %v360 = vld [vmem:[#allocation7 + $0xb0] sm:$0xff]
    %v361 = vld [vmem:[#allocation7 + $0xb8] sm:$0xff]
    %v362 = vld [vmem:[#allocation7 + $0xc0] sm:$0xff]
    %v363 = vld [vmem:[#allocation7 + $0xc8] sm:$0xff]
    %v364 = vld [vmem:[#allocation7 + $0xd0] sm:$0xff]
    %v365 = vld [vmem:[#allocation7 + $0xd8] sm:$0xff]
    %v366 = vld [vmem:[#allocation7 + $0xe0] sm:$0xff]
    %v367 = vld [vmem:[#allocation7 + $0xe8] sm:$0xff]
    %v368 = vld [vmem:[#allocation7 + $0xf0] sm:$0xff]
    %v369 = vld [vmem:[#allocation7 + $0xf8] sm:$0xff]
    %v370 = vld [vmem:[#allocation7 + $0x100] sm:$0xff]
    %v371 = vld [vmem:[#allocation7 + $0x108] sm:$0xff]
    %v372 = vld [vmem:[#allocation7 + $0x110] sm:$0xff]
    %v373 = vld [vmem:[#allocation7 + $0x118] sm:$0xff]
    %v374 = vld [vmem:[#allocation7 + $0x120] sm:$0xff]
    %v375 = vld [vmem:[#allocation7 + $0x128] sm:$0xff]
    %v376 = vld [vmem:[#allocation7 + $0x130] sm:$0xff]
    %v377 = vld [vmem:[#allocation7 + $0x138] sm:$0xff]
    %v378 = vld [vmem:[#allocation7 + $0x140] sm:$0xff]
    %v379 = vld [vmem:[#allocation7 + $0x148] sm:$0xff]
    %v380 = vld [vmem:[#allocation7 + $0x150] sm:$0xff]
    %v381 = vld [vmem:[#allocation7 + $0x158] sm:$0xff]
    %v382 = vld [vmem:[#allocation7 + $0x160] sm:$0xff]
    %v383 = vld [vmem:[#allocation7 + $0x168] sm:$0xff]
    %v384 = vld [vmem:[#allocation7 + $0x170] sm:$0xff]
    %v385 = vld [vmem:[#allocation7 + $0x178] sm:$0xff]
    %v386 = vld [vmem:[#allocation7 + $0x180] sm:$0xff]
    %v387 = vld [vmem:[#allocation7 + $0x188] sm:$0xff]
    %v388 = vld [vmem:[#allocation7 + $0x190] sm:$0xff]
    %v389 = vld [vmem:[#allocation7 + $0x198] sm:$0xff]
    %v390 = vld [vmem:[#allocation7 + $0x1a0] sm:$0xff]
    %v391 = vld [vmem:[#allocation7 + $0x1a8] sm:$0xff]
    %v392 = vld [vmem:[#allocation7 + $0x1b0] sm:$0xff]
    %v393 = vld [vmem:[#allocation7 + $0x1b8] sm:$0xff]
    %v394 = vld [vmem:[#allocation7 + $0x1c0] sm:$0xff]
    %v395 = vld [vmem:[#allocation7 + $0x1c8] sm:$0xff]
    %v396 = vld [vmem:[#allocation7 + $0x1d0] sm:$0xff]
    %v397 = vld [vmem:[#allocation7 + $0x1d8] sm:$0xff]
    %v398 = vld [vmem:[#allocation7 + $0x1e0] sm:$0xff]
    %v399 = vld [vmem:[#allocation7 + $0x1e8] sm:$0xff]
    %v400 = vld [vmem:[#allocation7 + $0x1f0] sm:$0xff]
    %v401 = vld [vmem:[#allocation7 + $0x1f8] sm:$0xff]
    %v402 = vld [vmem:[#allocation7 + $0x200] sm:$0xff]
    %v403 = vld [vmem:[#allocation7 + $0x208] sm:$0xff]
    %v404 = vld [vmem:[#allocation7 + $0x210] sm:$0xff]
    %v405 = vld [vmem:[#allocation7 + $0x218] sm:$0xff]
    %v406 = vld [vmem:[#allocation7 + $0x220] sm:$0xff]
    %v407 = vld [vmem:[#allocation7 + $0x228] sm:$0xff]
    %v408 = vld [vmem:[#allocation7 + $0x230] sm:$0xff]
    %v409 = vld [vmem:[#allocation7 + $0x238] sm:$0xff]
    %v410 = vld [vmem:[#allocation7 + $0x240] sm:$0xff]
    %v411 = vld [vmem:[#allocation7 + $0x248] sm:$0xff]
    %v412 = vld [vmem:[#allocation7 + $0x250] sm:$0xff]
    %v413 = vld [vmem:[#allocation7 + $0x258] sm:$0xff]
    %v414 = vld [vmem:[#allocation7 + $0x260] sm:$0xff]
    %v415 = vld [vmem:[#allocation7 + $0x268] sm:$0xff]
    %v416 = vld [vmem:[#allocation7 + $0x270] sm:$0xff]
    %v417 = vld [vmem:[#allocation7 + $0x278] sm:$0xff]
    %v418 = vld [vmem:[#allocation7 + $0x280] sm:$0xff]
    %v419 = vld [vmem:[#allocation7 + $0x288] sm:$0xff]
    %v420 = vld [vmem:[#allocation7 + $0x290] sm:$0xff]
    %v421 = vld [vmem:[#allocation7 + $0x298] sm:$0xff]
    %v422 = vld [vmem:[#allocation7 + $0x2a0] sm:$0xff]
    %v423 = vld [vmem:[#allocation7 + $0x2a8] sm:$0xff]
    %v424 = vld [vmem:[#allocation7 + $0x2b0] sm:$0xff]
    %v425 = vld [vmem:[#allocation7 + $0x2b8] sm:$0xff]
    %v426 = vld [vmem:[#allocation7 + $0x2c0] sm:$0xff]
    %v427 = vld [vmem:[#allocation7 + $0x2c8] sm:$0xff]
    %v428 = vld [vmem:[#allocation7 + $0x2d0] sm:$0xff]
    %v429 = vld [vmem:[#allocation7 + $0x2d8] sm:$0xff]
    %v430 = vld [vmem:[#allocation7 + $0x2e0] sm:$0xff]
    %v431 = vld [vmem:[#allocation7 + $0x2e8] sm:$0xff]
    %v432 = vld [vmem:[#allocation7 + $0x2f0] sm:$0xff]
    %v433 = vld [vmem:[#allocation7 + $0x2f8] sm:$0xff]
    %v434 = vld [vmem:[#allocation7 + $0x300] sm:$0xff]
    %v435 = vld [vmem:[#allocation7 + $0x308] sm:$0xff]
    %v436 = vld [vmem:[#allocation7 + $0x310] sm:$0xff]
    %v437 = vld [vmem:[#allocation7 + $0x318] sm:$0xff]
    %v438 = vld [vmem:[#allocation7 + $0x320] sm:$0xff]
    %v439 = vld [vmem:[#allocation7 + $0x328] sm:$0xff]
    %v440 = vld [vmem:[#allocation7 + $0x330] sm:$0xff]
    %v441 = vld [vmem:[#allocation7 + $0x338] sm:$0xff]
    %v442 = vld [vmem:[#allocation7 + $0x340] sm:$0xff]
    %v443 = vld [vmem:[#allocation7 + $0x348] sm:$0xff]
    %v444 = vld [vmem:[#allocation7 + $0x350] sm:$0xff]
    %v445 = vld [vmem:[#allocation7 + $0x358] sm:$0xff]
    %v446 = vld [vmem:[#allocation7 + $0x360] sm:$0xff]
    %v447 = vld [vmem:[#allocation7 + $0x368] sm:$0xff]
    %v448 = vld [vmem:[#allocation7 + $0x370] sm:$0xff]
    %v449 = vld [vmem:[#allocation7 + $0x378] sm:$0xff]
    %v450 = vld [vmem:[#allocation7 + $0x380] sm:$0xff]
    %v451 = vld [vmem:[#allocation7 + $0x388] sm:$0xff]
    %v452 = vld [vmem:[#allocation7 + $0x390] sm:$0xff]
    %v453 = vld [vmem:[#allocation7 + $0x398] sm:$0xff]
    %v454 = vld [vmem:[#allocation7 + $0x3a0] sm:$0xff]
    %v455 = vld [vmem:[#allocation7 + $0x3a8] sm:$0xff]
    %v456 = vld [vmem:[#allocation7 + $0x3b0] sm:$0xff]
    %v457 = vld [vmem:[#allocation7 + $0x3b8] sm:$0xff]
    %v458 = vld [vmem:[#allocation7 + $0x3c0] sm:$0xff]
    %v459 = vld [vmem:[#allocation7 + $0x3c8] sm:$0xff]
    %v460 = vld [vmem:[#allocation7 + $0x3d0] sm:$0xff]
    %v461 = vld [vmem:[#allocation7 + $0x3d8] sm:$0xff]
    %v462 = vld [vmem:[#allocation7 + $0x3e0] sm:$0xff]
    %v463 = vld [vmem:[#allocation7 + $0x3e8] sm:$0xff]
    %v464 = vld [vmem:[#allocation7 + $0x3f0] sm:$0xff]
    %v465 = vld [vmem:[#allocation7 + $0x3f8] sm:$0xff]
    %v466 = vld [vmem:[%s4] sm:$0x3]
    %468 = vset.pattern.permute.xlu0 0
    %469 = vperm.xlu0 %468, %v92
    %v470 = vpop.permute.xlu0 %469
    %v473 = vlaneseq
    %v474 = vshrl.u32 %v473, 7
    %v475 = vsub.s32 0, %v474
    %v476 = vrot.slane %v466, %v475
    %v477 = vlaneseq
    %v478 = vshrl.u32 %v477, 7
    %v479 = vsub.s32 1, %v478
    %v480 = vrot.slane %v466, %v479
    %v483 = vmul.f32 %v470, %v476
    %v484 = vmul.f32 %v470, %v480
    %v613 = vunpack.c.l.b16 %v338
    %v614 = vunpack.c.h.b16 %v338
    %v615 = vunpack.c.l.b16 %v339
    %v616 = vunpack.c.h.b16 %v339
    %v617 = vunpack.c.l.b16 %v340
    %v618 = vunpack.c.h.b16 %v340
    %v619 = vunpack.c.l.b16 %v341
    %v620 = vunpack.c.h.b16 %v341
    %v621 = vunpack.c.l.b16 %v342
    %v622 = vunpack.c.h.b16 %v342
    %v623 = vunpack.c.l.b16 %v343
    %v624 = vunpack.c.h.b16 %v343
    %v625 = vunpack.c.l.b16 %v344
    %v626 = vunpack.c.h.b16 %v344
    %v627 = vunpack.c.l.b16 %v345
    %v628 = vunpack.c.h.b16 %v345
    %v629 = vunpack.c.l.b16 %v346
    %v630 = vunpack.c.h.b16 %v346
    %v631 = vunpack.c.l.b16 %v347
    %v632 = vunpack.c.h.b16 %v347
    %v633 = vunpack.c.l.b16 %v348
    %v634 = vunpack.c.h.b16 %v348
    %v635 = vunpack.c.l.b16 %v349
    %v636 = vunpack.c.h.b16 %v349
    %v637 = vunpack.c.l.b16 %v350
    %v638 = vunpack.c.h.b16 %v350
    %v639 = vunpack.c.l.b16 %v351
    %v640 = vunpack.c.h.b16 %v351
    %v641 = vunpack.c.l.b16 %v352
    %v642 = vunpack.c.h.b16 %v352
    %v643 = vunpack.c.l.b16 %v353
    %v644 = vunpack.c.h.b16 %v353
    %v645 = vunpack.c.l.b16 %v354
    %v646 = vunpack.c.h.b16 %v354
    %v647 = vunpack.c.l.b16 %v355
    %v648 = vunpack.c.h.b16 %v355
    %v649 = vunpack.c.l.b16 %v356
    %v650 = vunpack.c.h.b16 %v356
    %v651 = vunpack.c.l.b16 %v357
    %v652 = vunpack.c.h.b16 %v357
    %v653 = vunpack.c.l.b16 %v358
    %v654 = vunpack.c.h.b16 %v358
    %v655 = vunpack.c.l.b16 %v359
    %v656 = vunpack.c.h.b16 %v359
    %v657 = vunpack.c.l.b16 %v360
    %v658 = vunpack.c.h.b16 %v360
    %v659 = vunpack.c.l.b16 %v361
    %v660 = vunpack.c.h.b16 %v361
    %v661 = vunpack.c.l.b16 %v362
    %v662 = vunpack.c.h.b16 %v362
    %v663 = vunpack.c.l.b16 %v363
    %v664 = vunpack.c.h.b16 %v363
    %v665 = vunpack.c.l.b16 %v364
    %v666 = vunpack.c.h.b16 %v364
    %v667 = vunpack.c.l.b16 %v365
    %v668 = vunpack.c.h.b16 %v365
    %v669 = vunpack.c.l.b16 %v366
    %v670 = vunpack.c.h.b16 %v366
    %v671 = vunpack.c.l.b16 %v367
    %v672 = vunpack.c.h.b16 %v367
    %v673 = vunpack.c.l.b16 %v368
    %v674 = vunpack.c.h.b16 %v368
    %v675 = vunpack.c.l.b16 %v369
    %v676 = vunpack.c.h.b16 %v369
    %v677 = vunpack.c.l.b16 %v370
    %v678 = vunpack.c.h.b16 %v370
    %v679 = vunpack.c.l.b16 %v371
    %v680 = vunpack.c.h.b16 %v371
    %v681 = vunpack.c.l.b16 %v372
    %v682 = vunpack.c.h.b16 %v372
    %v683 = vunpack.c.l.b16 %v373
    %v684 = vunpack.c.h.b16 %v373
    %v685 = vunpack.c.l.b16 %v374
    %v686 = vunpack.c.h.b16 %v374
    %v687 = vunpack.c.l.b16 %v375
    %v688 = vunpack.c.h.b16 %v375
    %v689 = vunpack.c.l.b16 %v376
    %v690 = vunpack.c.h.b16 %v376
    %v691 = vunpack.c.l.b16 %v377
    %v692 = vunpack.c.h.b16 %v377
    %v693 = vunpack.c.l.b16 %v378
    %v694 = vunpack.c.h.b16 %v378
    %v695 = vunpack.c.l.b16 %v379
    %v696 = vunpack.c.h.b16 %v379
    %v697 = vunpack.c.l.b16 %v380
    %v698 = vunpack.c.h.b16 %v380
    %v699 = vunpack.c.l.b16 %v381
    %v700 = vunpack.c.h.b16 %v381
    %v701 = vunpack.c.l.b16 %v382
    %v702 = vunpack.c.h.b16 %v382
    %v703 = vunpack.c.l.b16 %v383
    %v704 = vunpack.c.h.b16 %v383
    %v705 = vunpack.c.l.b16 %v384
    %v706 = vunpack.c.h.b16 %v384
    %v707 = vunpack.c.l.b16 %v385
    %v708 = vunpack.c.h.b16 %v385
    %v709 = vunpack.c.l.b16 %v386
    %v710 = vunpack.c.h.b16 %v386
    %v711 = vunpack.c.l.b16 %v387
    %v712 = vunpack.c.h.b16 %v387
    %v713 = vunpack.c.l.b16 %v388
    %v714 = vunpack.c.h.b16 %v388
    %v715 = vunpack.c.l.b16 %v389
    %v716 = vunpack.c.h.b16 %v389
    %v717 = vunpack.c.l.b16 %v390
    %v718 = vunpack.c.h.b16 %v390
    %v719 = vunpack.c.l.b16 %v391
    %v720 = vunpack.c.h.b16 %v391
    %v721 = vunpack.c.l.b16 %v392
    %v722 = vunpack.c.h.b16 %v392
    %v723 = vunpack.c.l.b16 %v393
    %v724 = vunpack.c.h.b16 %v393
    %v725 = vunpack.c.l.b16 %v394
    %v726 = vunpack.c.h.b16 %v394
    %v727 = vunpack.c.l.b16 %v395
    %v728 = vunpack.c.h.b16 %v395
    %v729 = vunpack.c.l.b16 %v396
    %v730 = vunpack.c.h.b16 %v396
    %v731 = vunpack.c.l.b16 %v397
    %v732 = vunpack.c.h.b16 %v397
    %v733 = vunpack.c.l.b16 %v398
    %v734 = vunpack.c.h.b16 %v398
    %v735 = vunpack.c.l.b16 %v399
    %v736 = vunpack.c.h.b16 %v399
    %v737 = vunpack.c.l.b16 %v400
    %v738 = vunpack.c.h.b16 %v400
    %v739 = vunpack.c.l.b16 %v401
    %v740 = vunpack.c.h.b16 %v401
    %v741 = vunpack.c.l.b16 %v402
    %v742 = vunpack.c.h.b16 %v402
    %v743 = vunpack.c.l.b16 %v403
    %v744 = vunpack.c.h.b16 %v403
    %v745 = vunpack.c.l.b16 %v404
    %v746 = vunpack.c.h.b16 %v404
    %v747 = vunpack.c.l.b16 %v405
    %v748 = vunpack.c.h.b16 %v405
    %v749 = vunpack.c.l.b16 %v406
    %v750 = vunpack.c.h.b16 %v406
    %v751 = vunpack.c.l.b16 %v407
    %v752 = vunpack.c.h.b16 %v407
    %v753 = vunpack.c.l.b16 %v408
    %v754 = vunpack.c.h.b16 %v408
    %v755 = vunpack.c.l.b16 %v409
    %v756 = vunpack.c.h.b16 %v409
    %v757 = vunpack.c.l.b16 %v410
    %v758 = vunpack.c.h.b16 %v410
    %v759 = vunpack.c.l.b16 %v411
    %v760 = vunpack.c.h.b16 %v411
    %v761 = vunpack.c.l.b16 %v412
    %v762 = vunpack.c.h.b16 %v412
    %v763 = vunpack.c.l.b16 %v413
    %v764 = vunpack.c.h.b16 %v413
    %v765 = vunpack.c.l.b16 %v414
    %v766 = vunpack.c.h.b16 %v414
    %v767 = vunpack.c.l.b16 %v415
    %v768 = vunpack.c.h.b16 %v415
    %v769 = vunpack.c.l.b16 %v416
    %v770 = vunpack.c.h.b16 %v416
    %v771 = vunpack.c.l.b16 %v417
    %v772 = vunpack.c.h.b16 %v417
    %v773 = vunpack.c.l.b16 %v418
    %v774 = vunpack.c.h.b16 %v418
    %v775 = vunpack.c.l.b16 %v419
    %v776 = vunpack.c.h.b16 %v419
    %v777 = vunpack.c.l.b16 %v420
    %v778 = vunpack.c.h.b16 %v420
    %v779 = vunpack.c.l.b16 %v421
    %v780 = vunpack.c.h.b16 %v421
    %v781 = vunpack.c.l.b16 %v422
    %v782 = vunpack.c.h.b16 %v422
    %v783 = vunpack.c.l.b16 %v423
    %v784 = vunpack.c.h.b16 %v423
    %v785 = vunpack.c.l.b16 %v424
    %v786 = vunpack.c.h.b16 %v424
    %v787 = vunpack.c.l.b16 %v425
    %v788 = vunpack.c.h.b16 %v425
    %v789 = vunpack.c.l.b16 %v426
    %v790 = vunpack.c.h.b16 %v426
    %v791 = vunpack.c.l.b16 %v427
    %v792 = vunpack.c.h.b16 %v427
    %v793 = vunpack.c.l.b16 %v428
    %v794 = vunpack.c.h.b16 %v428
    %v795 = vunpack.c.l.b16 %v429
    %v796 = vunpack.c.h.b16 %v429
    %v797 = vunpack.c.l.b16 %v430
    %v798 = vunpack.c.h.b16 %v430
    %v799 = vunpack.c.l.b16 %v431
    %v800 = vunpack.c.h.b16 %v431
    %v801 = vunpack.c.l.b16 %v432
    %v802 = vunpack.c.h.b16 %v432
    %v803 = vunpack.c.l.b16 %v433
    %v804 = vunpack.c.h.b16 %v433
    %v805 = vunpack.c.l.b16 %v434
    %v806 = vunpack.c.h.b16 %v434
    %v807 = vunpack.c.l.b16 %v435
    %v808 = vunpack.c.h.b16 %v435
    %v809 = vunpack.c.l.b16 %v436
    %v810 = vunpack.c.h.b16 %v436
    %v811 = vunpack.c.l.b16 %v437
    %v812 = vunpack.c.h.b16 %v437
    %v813 = vunpack.c.l.b16 %v438
    %v814 = vunpack.c.h.b16 %v438
    %v815 = vunpack.c.l.b16 %v439
    %v816 = vunpack.c.h.b16 %v439
    %v817 = vunpack.c.l.b16 %v440
    %v818 = vunpack.c.h.b16 %v440
    %v819 = vunpack.c.l.b16 %v441
    %v820 = vunpack.c.h.b16 %v441
    %v821 = vunpack.c.l.b16 %v442
    %v822 = vunpack.c.h.b16 %v442
    %v823 = vunpack.c.l.b16 %v443
    %v824 = vunpack.c.h.b16 %v443
    %v825 = vunpack.c.l.b16 %v444
    %v826 = vunpack.c.h.b16 %v444
    %v827 = vunpack.c.l.b16 %v445
    %v828 = vunpack.c.h.b16 %v445
    %v829 = vunpack.c.l.b16 %v446
    %v830 = vunpack.c.h.b16 %v446
    %v831 = vunpack.c.l.b16 %v447
    %v832 = vunpack.c.h.b16 %v447
    %v833 = vunpack.c.l.b16 %v448
    %v834 = vunpack.c.h.b16 %v448
    %v835 = vunpack.c.l.b16 %v449
    %v836 = vunpack.c.h.b16 %v449
    %v837 = vunpack.c.l.b16 %v450
    %v838 = vunpack.c.h.b16 %v450
    %v839 = vunpack.c.l.b16 %v451
    %v840 = vunpack.c.h.b16 %v451
    %v841 = vunpack.c.l.b16 %v452
    %v842 = vunpack.c.h.b16 %v452
    %v843 = vunpack.c.l.b16 %v453
    %v844 = vunpack.c.h.b16 %v453
    %v845 = vunpack.c.l.b16 %v454
    %v846 = vunpack.c.h.b16 %v454
    %v847 = vunpack.c.l.b16 %v455
    %v848 = vunpack.c.h.b16 %v455
    %v849 = vunpack.c.l.b16 %v456
    %v850 = vunpack.c.h.b16 %v456
    %v851 = vunpack.c.l.b16 %v457
    %v852 = vunpack.c.h.b16 %v457
    %v853 = vunpack.c.l.b16 %v458
    %v854 = vunpack.c.h.b16 %v458
    %v855 = vunpack.c.l.b16 %v459
    %v856 = vunpack.c.h.b16 %v459
    %v857 = vunpack.c.l.b16 %v460
    %v858 = vunpack.c.h.b16 %v460
    %v859 = vunpack.c.l.b16 %v461
    %v860 = vunpack.c.h.b16 %v461
    %v861 = vunpack.c.l.b16 %v462
    %v862 = vunpack.c.h.b16 %v462
    %v863 = vunpack.c.l.b16 %v463
    %v864 = vunpack.c.h.b16 %v463
    %v865 = vunpack.c.l.b16 %v464
    %v866 = vunpack.c.h.b16 %v464
    %v867 = vunpack.c.l.b16 %v465
    %v868 = vunpack.c.h.b16 %v465
    %v869 = vpack.c.b16 %v615, %v613
    %v870 = vpack.c.b16 %v616, %v614
    %v871 = vpack.c.b16 %v619, %v617
    %v872 = vpack.c.b16 %v620, %v618
    %v873 = vpack.c.b16 %v623, %v621
    %v874 = vpack.c.b16 %v624, %v622
    %v875 = vpack.c.b16 %v627, %v625
    %v876 = vpack.c.b16 %v628, %v626
    %v877 = vpack.c.b16 %v631, %v629
    %v878 = vpack.c.b16 %v632, %v630
    %v879 = vpack.c.b16 %v635, %v633
    %v880 = vpack.c.b16 %v636, %v634
    %v881 = vpack.c.b16 %v639, %v637
    %v882 = vpack.c.b16 %v640, %v638
    %v883 = vpack.c.b16 %v643, %v641
    %v884 = vpack.c.b16 %v644, %v642
    %v885 = vpack.c.b16 %v647, %v645
    %v886 = vpack.c.b16 %v648, %v646
    %v887 = vpack.c.b16 %v651, %v649
    %v888 = vpack.c.b16 %v652, %v650
    %v889 = vpack.c.b16 %v655, %v653
    %v890 = vpack.c.b16 %v656, %v654
    %v891 = vpack.c.b16 %v659, %v657
    %v892 = vpack.c.b16 %v660, %v658
    %v893 = vpack.c.b16 %v663, %v661
    %v894 = vpack.c.b16 %v664, %v662
    %v895 = vpack.c.b16 %v667, %v665
    %v896 = vpack.c.b16 %v668, %v666
    %v897 = vpack.c.b16 %v671, %v669
    %v898 = vpack.c.b16 %v672, %v670
    %v899 = vpack.c.b16 %v675, %v673
    %v900 = vpack.c.b16 %v676, %v674
    %v901 = vpack.c.b16 %v679, %v677
    %v902 = vpack.c.b16 %v680, %v678
    %v903 = vpack.c.b16 %v683, %v681
    %v904 = vpack.c.b16 %v684, %v682
    %v905 = vpack.c.b16 %v687, %v685
    %v906 = vpack.c.b16 %v688, %v686
    %v907 = vpack.c.b16 %v691, %v689
    %v908 = vpack.c.b16 %v692, %v690
    %v909 = vpack.c.b16 %v695, %v693
    %v910 = vpack.c.b16 %v696, %v694
    %v911 = vpack.c.b16 %v699, %v697
    %v912 = vpack.c.b16 %v700, %v698
    %v913 = vpack.c.b16 %v703, %v701
    %v914 = vpack.c.b16 %v704, %v702
    %v915 = vpack.c.b16 %v707, %v705
    %v916 = vpack.c.b16 %v708, %v706
    %v917 = vpack.c.b16 %v711, %v709
    %v918 = vpack.c.b16 %v712, %v710
    %v919 = vpack.c.b16 %v715, %v713
    %v920 = vpack.c.b16 %v716, %v714
    %v921 = vpack.c.b16 %v719, %v717
    %v922 = vpack.c.b16 %v720, %v718
    %v923 = vpack.c.b16 %v723, %v721
    %v924 = vpack.c.b16 %v724, %v722
    %v925 = vpack.c.b16 %v727, %v725
    %v926 = vpack.c.b16 %v728, %v726
    %v927 = vpack.c.b16 %v731, %v729
    %v928 = vpack.c.b16 %v732, %v730
    %v929 = vpack.c.b16 %v735, %v733
    %v930 = vpack.c.b16 %v736, %v734
    %v931 = vpack.c.b16 %v739, %v737
    %v932 = vpack.c.b16 %v740, %v738
    %v933 = vpack.c.b16 %v743, %v741
    %v934 = vpack.c.b16 %v744, %v742
    %v935 = vpack.c.b16 %v747, %v745
    %v936 = vpack.c.b16 %v748, %v746
    %v937 = vpack.c.b16 %v751, %v749
    %v938 = vpack.c.b16 %v752, %v750
    %v939 = vpack.c.b16 %v755, %v753
    %v940 = vpack.c.b16 %v756, %v754
    %v941 = vpack.c.b16 %v759, %v757
    %v942 = vpack.c.b16 %v760, %v758
    %v943 = vpack.c.b16 %v763, %v761
    %v944 = vpack.c.b16 %v764, %v762
    %v945 = vpack.c.b16 %v767, %v765
    %v946 = vpack.c.b16 %v768, %v766
    %v947 = vpack.c.b16 %v771, %v769
    %v948 = vpack.c.b16 %v772, %v770
    %v949 = vpack.c.b16 %v775, %v773
    %v950 = vpack.c.b16 %v776, %v774
    %v951 = vpack.c.b16 %v779, %v777
    %v952 = vpack.c.b16 %v780, %v778
    %v953 = vpack.c.b16 %v783, %v781
    %v954 = vpack.c.b16 %v784, %v782
    %v955 = vpack.c.b16 %v787, %v785
    %v956 = vpack.c.b16 %v788, %v786
    %v957 = vpack.c.b16 %v791, %v789
    %v958 = vpack.c.b16 %v792, %v790
    %v959 = vpack.c.b16 %v795, %v793
    %v960 = vpack.c.b16 %v796, %v794
    %v961 = vpack.c.b16 %v799, %v797
    %v962 = vpack.c.b16 %v800, %v798
    %v963 = vpack.c.b16 %v803, %v801
    %v964 = vpack.c.b16 %v804, %v802
    %v965 = vpack.c.b16 %v807, %v805
    %v966 = vpack.c.b16 %v808, %v806
    %v967 = vpack.c.b16 %v811, %v809
    %v968 = vpack.c.b16 %v812, %v810
    %v969 = vpack.c.b16 %v815, %v813
    %v970 = vpack.c.b16 %v816, %v814
    %v971 = vpack.c.b16 %v819, %v817
    %v972 = vpack.c.b16 %v820, %v818
    %v973 = vpack.c.b16 %v823, %v821
    %v974 = vpack.c.b16 %v824, %v822
    %v975 = vpack.c.b16 %v827, %v825
    %v976 = vpack.c.b16 %v828, %v826
    %v977 = vpack.c.b16 %v831, %v829
    %v978 = vpack.c.b16 %v832, %v830
    %v979 = vpack.c.b16 %v835, %v833
    %v980 = vpack.c.b16 %v836, %v834
    %v981 = vpack.c.b16 %v839, %v837
    %v982 = vpack.c.b16 %v840, %v838
    %v983 = vpack.c.b16 %v843, %v841
    %v984 = vpack.c.b16 %v844, %v842
    %v985 = vpack.c.b16 %v847, %v845
    %v986 = vpack.c.b16 %v848, %v846
    %v987 = vpack.c.b16 %v851, %v849
    %v988 = vpack.c.b16 %v852, %v850
    %v989 = vpack.c.b16 %v855, %v853
    %v990 = vpack.c.b16 %v856, %v854
    %v991 = vpack.c.b16 %v859, %v857
    %v992 = vpack.c.b16 %v860, %v858
    %v993 = vpack.c.b16 %v863, %v861
    %v994 = vpack.c.b16 %v864, %v862
    %v995 = vpack.c.b16 %v867, %v865
    %v996 = vpack.c.b16 %v868, %v866
    %1125 = vmatprep.subr.bf16.mxu0 %v884
    %1126 = vmatpush1.bf16.msra.mxu0 %v883
    %1127 = vmatprep.subr.bf16.mxu0 %v882
    %1128 = vmatpush1.bf16.msra.mxu0 %v881
    %1129 = vmatprep.subr.bf16.mxu0 %v880
    %1130 = vmatpush1.bf16.msra.mxu0 %v879
    %1131 = vmatprep.subr.bf16.mxu0 %v878
    %1132 = vmatpush1.bf16.msra.mxu0 %v877
    %1133 = vmatprep.subr.bf16.mxu0 %v876
    %1134 = vmatpush1.bf16.msra.mxu0 %v875
    %1135 = vmatprep.subr.bf16.mxu0 %v874
    %1136 = vmatpush1.bf16.msra.mxu0 %v873
    %1137 = vmatprep.subr.bf16.mxu0 %v872
    %1138 = vmatpush1.bf16.msra.mxu0 %v871
    %1139 = vmatprep.subr.bf16.mxu0 %v870
    %1140 = vmatpush1.bf16.msra.mxu0 %v869
    %1141 = vmatprep.subr.bf16.mxu0 %v900
    %1142 = vmatpush2.bf16.msra.mxu0 %v899
    %1143 = vmatprep.subr.bf16.mxu0 %v898
    %1144 = vmatpush2.bf16.msra.mxu0 %v897
    %1145 = vmatprep.subr.bf16.mxu0 %v896
    %1146 = vmatpush2.bf16.msra.mxu0 %v895
    %1147 = vmatprep.subr.bf16.mxu0 %v894
    %1148 = vmatpush2.bf16.msra.mxu0 %v893
    %1149 = vmatprep.subr.bf16.mxu0 %v892
    %1150 = vmatpush2.bf16.msra.mxu0 %v891
    %1151 = vmatprep.subr.bf16.mxu0 %v890
    %1152 = vmatpush2.bf16.msra.mxu0 %v889
    %1153 = vmatprep.subr.bf16.mxu0 %v888
    %1154 = vmatpush2.bf16.msra.mxu0 %v887
    %1155 = vmatprep.subr.bf16.mxu0 %v886
    %1156 = vmatpush2.bf16.msra.mxu0 %v885
    %1157 = vmatprep.mubr.bf16.mxu0 %v331
    %1158 = vmatmul.mubr.bf16.gmra.mxu0 %v330
    %v1159 = vpop.f32.mrf.mxu0
    %v1160 = vadd.f32 %v483, %v1159
    %v1161 = vpop.f32.mrf.mxu0
    %v1162 = vadd.f32 %v484, %v1161
    %v1163 = vpop.f32.mrf.mxu0
    %v1164 = vpop.f32.mrf.mxu0
    %1165 = vdwg.mxu0
    %1166 = vmatprep.subr.bf16.mxu0 %v916
    %1167 = vmatpush1.bf16.msra.mxu0 %v915
    %1168 = vmatprep.subr.bf16.mxu0 %v914
    %1169 = vmatpush1.bf16.msra.mxu0 %v913
    %1170 = vmatprep.subr.bf16.mxu0 %v912
    %1171 = vmatpush1.bf16.msra.mxu0 %v911
    %1172 = vmatprep.subr.bf16.mxu0 %v910
    %1173 = vmatpush1.bf16.msra.mxu0 %v909
    %1174 = vmatprep.subr.bf16.mxu0 %v908
    %1175 = vmatpush1.bf16.msra.mxu0 %v907
    %1176 = vmatprep.subr.bf16.mxu0 %v906
    %1177 = vmatpush1.bf16.msra.mxu0 %v905
    %1178 = vmatprep.subr.bf16.mxu0 %v904
    %1179 = vmatpush1.bf16.msra.mxu0 %v903
    %1180 = vmatprep.subr.bf16.mxu0 %v902
    %1181 = vmatpush1.bf16.msra.mxu0 %v901
    %1182 = vmatprep.subr.bf16.mxu0 %v932
    %1183 = vmatpush2.bf16.msra.mxu0 %v931
    %1184 = vmatprep.subr.bf16.mxu0 %v930
    %1185 = vmatpush2.bf16.msra.mxu0 %v929
    %1186 = vmatprep.subr.bf16.mxu0 %v928
    %1187 = vmatpush2.bf16.msra.mxu0 %v927
    %1188 = vmatprep.subr.bf16.mxu0 %v926
    %1189 = vmatpush2.bf16.msra.mxu0 %v925
    %1190 = vmatprep.subr.bf16.mxu0 %v924
    %1191 = vmatpush2.bf16.msra.mxu0 %v923
    %1192 = vmatprep.subr.bf16.mxu0 %v922
    %1193 = vmatpush2.bf16.msra.mxu0 %v921
    %1194 = vmatprep.subr.bf16.mxu0 %v920
    %1195 = vmatpush2.bf16.msra.mxu0 %v919
    %1196 = vmatprep.subr.bf16.mxu0 %v918
    %1197 = vmatpush2.bf16.msra.mxu0 %v917
    %1198 = vmatprep.mubr.bf16.mxu0 %v333
    %1199 = vmatmul.mubr.bf16.gmra.mxu0 %v332
    %v1200 = vpop.f32.mrf.mxu0
    %v1201 = vadd.f32 %v1160, %v1200
    %v1202 = vpop.f32.mrf.mxu0
    %v1203 = vadd.f32 %v1162, %v1202
    %v1204 = vpop.f32.mrf.mxu0
    %v1205 = vpop.f32.mrf.mxu0
    %1206 = vdwg.mxu0
    %1207 = vmatprep.subr.bf16.mxu0 %v948
    %1208 = vmatpush1.bf16.msra.mxu0 %v947
    %1209 = vmatprep.subr.bf16.mxu0 %v946
    %1210 = vmatpush1.bf16.msra.mxu0 %v945
    %1211 = vmatprep.subr.bf16.mxu0 %v944
    %1212 = vmatpush1.bf16.msra.mxu0 %v943
    %1213 = vmatprep.subr.bf16.mxu0 %v942
    %1214 = vmatpush1.bf16.msra.mxu0 %v941
    %1215 = vmatprep.subr.bf16.mxu0 %v940
    %1216 = vmatpush1.bf16.msra.mxu0 %v939
    %1217 = vmatprep.subr.bf16.mxu0 %v938
    %1218 = vmatpush1.bf16.msra.mxu0 %v937
    %1219 = vmatprep.subr.bf16.mxu0 %v936
    %1220 = vmatpush1.bf16.msra.mxu0 %v935
    %1221 = vmatprep.subr.bf16.mxu0 %v934
    %1222 = vmatpush1.bf16.msra.mxu0 %v933
    %1223 = vmatprep.subr.bf16.mxu0 %v964
    %1224 = vmatpush2.bf16.msra.mxu0 %v963
    %1225 = vmatprep.subr.bf16.mxu0 %v962
    %1226 = vmatpush2.bf16.msra.mxu0 %v961
    %1227 = vmatprep.subr.bf16.mxu0 %v960
    %1228 = vmatpush2.bf16.msra.mxu0 %v959
    %1229 = vmatprep.subr.bf16.mxu0 %v958
    %1230 = vmatpush2.bf16.msra.mxu0 %v957
    %1231 = vmatprep.subr.bf16.mxu0 %v956
    %1232 = vmatpush2.bf16.msra.mxu0 %v955
    %1233 = vmatprep.subr.bf16.mxu0 %v954
    %1234 = vmatpush2.bf16.msra.mxu0 %v953
    %1235 = vmatprep.subr.bf16.mxu0 %v952
    %1236 = vmatpush2.bf16.msra.mxu0 %v951
    %1237 = vmatprep.subr.bf16.mxu0 %v950
    %1238 = vmatpush2.bf16.msra.mxu0 %v949
    %1239 = vmatprep.mubr.bf16.mxu0 %v335
    %1240 = vmatmul.mubr.bf16.gmra.mxu0 %v334
    %v1241 = vpop.f32.mrf.mxu0
    %v1242 = vadd.f32 %v1201, %v1241
    %v1243 = vpop.f32.mrf.mxu0
    %v1244 = vadd.f32 %v1203, %v1243
    %v1245 = vpop.f32.mrf.mxu0
    %v1246 = vpop.f32.mrf.mxu0
    %1247 = vdwg.mxu0
    %1248 = vmatprep.subr.bf16.mxu0 %v980
    %1249 = vmatpush1.bf16.msra.mxu0 %v979
    %1250 = vmatprep.subr.bf16.mxu0 %v978
    %1251 = vmatpush1.bf16.msra.mxu0 %v977
    %1252 = vmatprep.subr.bf16.mxu0 %v976
    %1253 = vmatpush1.bf16.msra.mxu0 %v975
    %1254 = vmatprep.subr.bf16.mxu0 %v974
    %1255 = vmatpush1.bf16.msra.mxu0 %v973
    %1256 = vmatprep.subr.bf16.mxu0 %v972
    %1257 = vmatpush1.bf16.msra.mxu0 %v971
    %1258 = vmatprep.subr.bf16.mxu0 %v970
    %1259 = vmatpush1.bf16.msra.mxu0 %v969
    %1260 = vmatprep.subr.bf16.mxu0 %v968
    %1261 = vmatpush1.bf16.msra.mxu0 %v967
    %1262 = vmatprep.subr.bf16.mxu0 %v966
    %1263 = vmatpush1.bf16.msra.mxu0 %v965
    %1264 = vmatprep.subr.bf16.mxu0 %v996
    %1265 = vmatpush2.bf16.msra.mxu0 %v995
    %1266 = vmatprep.subr.bf16.mxu0 %v994
    %1267 = vmatpush2.bf16.msra.mxu0 %v993
    %1268 = vmatprep.subr.bf16.mxu0 %v992
    %1269 = vmatpush2.bf16.msra.mxu0 %v991
    %1270 = vmatprep.subr.bf16.mxu0 %v990
    %1271 = vmatpush2.bf16.msra.mxu0 %v989
    %1272 = vmatprep.subr.bf16.mxu0 %v988
    %1273 = vmatpush2.bf16.msra.mxu0 %v987
    %1274 = vmatprep.subr.bf16.mxu0 %v986
    %1275 = vmatpush2.bf16.msra.mxu0 %v985
    %1276 = vmatprep.subr.bf16.mxu0 %v984
    %1277 = vmatpush2.bf16.msra.mxu0 %v983
    %1278 = vmatprep.subr.bf16.mxu0 %v982
    %1279 = vmatpush2.bf16.msra.mxu0 %v981
    %1280 = vmatprep.mubr.bf16.mxu0 %v337
    %1281 = vmatmul.mubr.bf16.gmra.mxu0 %v336
    %v1282 = vpop.f32.mrf.mxu0
    %v1283 = vadd.f32 %v1242, %v1282
    %v1284 = vpop.f32.mrf.mxu0
    %v1285 = vadd.f32 %v1244, %v1284
    %v1286 = vpop.f32.mrf.mxu0
    %v1287 = vpop.f32.mrf.mxu0
    %1288 = vdwg.mxu0
    %v1289 = vld [vmem:[%s5] sm:$0x3]
    %v1291 = vlaneseq
    %v1292 = vshrl.u32 %v1291, 7
    %v1293 = vsub.s32 0, %v1292
    %v1294 = vrot.slane %v1289, %v1293
    %v1295 = vlaneseq
    %v1296 = vshrl.u32 %v1295, 7
    %v1297 = vsub.s32 1, %v1296
    %v1298 = vrot.slane %v1289, %v1297
    %v1301 = vadd.f32 %v1283, %v1294
    %v1302 = vadd.f32 %v1285, %v1298
    %v1303 = vmax.f32 %v1301, 0.0
    %v1304 = vmax.f32 %v1302, 0.0
    %v1305 = vpack.c.bf16 %v1303, %v1303
    %v1306 = vpack.c.bf16 %v1304, %v1304
    %v1307 = vld [vmem:[#allocation8] sm:$0xff]
    %v1308 = vld [vmem:[#allocation8 + $0x8] sm:$0xff]
    %v1309 = vld [vmem:[#allocation8 + $0x10] sm:$0xff]
    %v1310 = vld [vmem:[#allocation8 + $0x18] sm:$0xff]
    %v1311 = vld [vmem:[#allocation8 + $0x20] sm:$0xff]
    %v1312 = vld [vmem:[#allocation8 + $0x28] sm:$0xff]
    %v1313 = vld [vmem:[#allocation8 + $0x30] sm:$0xff]
    %v1314 = vld [vmem:[#allocation8 + $0x38] sm:$0xff]
    %v1315 = vld [vmem:[#allocation8 + $0x40] sm:$0xff]
    %v1316 = vld [vmem:[#allocation8 + $0x48] sm:$0xff]
    %v1317 = vld [vmem:[#allocation8 + $0x50] sm:$0xff]
    %v1318 = vld [vmem:[#allocation8 + $0x58] sm:$0xff]
    %v1319 = vld [vmem:[#allocation8 + $0x60] sm:$0xff]
    %v1320 = vld [vmem:[#allocation8 + $0x68] sm:$0xff]
    %v1321 = vld [vmem:[#allocation8 + $0x70] sm:$0xff]
    %v1322 = vld [vmem:[#allocation8 + $0x78] sm:$0xff]
    %v1323 = vld [vmem:[#allocation8 + $0x80] sm:$0xff]
    %v1324 = vld [vmem:[#allocation8 + $0x88] sm:$0xff]
    %v1325 = vld [vmem:[#allocation8 + $0x90] sm:$0xff]
    %v1326 = vld [vmem:[#allocation8 + $0x98] sm:$0xff]
    %v1327 = vld [vmem:[#allocation8 + $0xa0] sm:$0xff]
    %v1328 = vld [vmem:[#allocation8 + $0xa8] sm:$0xff]
    %v1329 = vld [vmem:[#allocation8 + $0xb0] sm:$0xff]
    %v1330 = vld [vmem:[#allocation8 + $0xb8] sm:$0xff]
    %v1331 = vld [vmem:[#allocation8 + $0xc0] sm:$0xff]
    %v1332 = vld [vmem:[#allocation8 + $0xc8] sm:$0xff]
    %v1333 = vld [vmem:[#allocation8 + $0xd0] sm:$0xff]
    %v1334 = vld [vmem:[#allocation8 + $0xd8] sm:$0xff]
    %v1335 = vld [vmem:[#allocation8 + $0xe0] sm:$0xff]
    %v1336 = vld [vmem:[#allocation8 + $0xe8] sm:$0xff]
    %v1337 = vld [vmem:[#allocation8 + $0xf0] sm:$0xff]
    %v1338 = vld [vmem:[#allocation8 + $0xf8] sm:$0xff]
    %v1339 = vld [vmem:[#allocation8 + $0x100] sm:$0xff]
    %v1340 = vld [vmem:[#allocation8 + $0x108] sm:$0xff]
    %v1341 = vld [vmem:[#allocation8 + $0x110] sm:$0xff]
    %v1342 = vld [vmem:[#allocation8 + $0x118] sm:$0xff]
    %v1343 = vld [vmem:[#allocation8 + $0x120] sm:$0xff]
    %v1344 = vld [vmem:[#allocation8 + $0x128] sm:$0xff]
    %v1345 = vld [vmem:[#allocation8 + $0x130] sm:$0xff]
    %v1346 = vld [vmem:[#allocation8 + $0x138] sm:$0xff]
    %v1347 = vld [vmem:[#allocation8 + $0x140] sm:$0xff]
    %v1348 = vld [vmem:[#allocation8 + $0x148] sm:$0xff]
    %v1349 = vld [vmem:[#allocation8 + $0x150] sm:$0xff]
    %v1350 = vld [vmem:[#allocation8 + $0x158] sm:$0xff]
    %v1351 = vld [vmem:[#allocation8 + $0x160] sm:$0xff]
    %v1352 = vld [vmem:[#allocation8 + $0x168] sm:$0xff]
    %v1353 = vld [vmem:[#allocation8 + $0x170] sm:$0xff]
    %v1354 = vld [vmem:[#allocation8 + $0x178] sm:$0xff]
    %v1355 = vld [vmem:[#allocation8 + $0x180] sm:$0xff]
    %v1356 = vld [vmem:[#allocation8 + $0x188] sm:$0xff]
    %v1357 = vld [vmem:[#allocation8 + $0x190] sm:$0xff]
    %v1358 = vld [vmem:[#allocation8 + $0x198] sm:$0xff]
    %v1359 = vld [vmem:[#allocation8 + $0x1a0] sm:$0xff]
    %v1360 = vld [vmem:[#allocation8 + $0x1a8] sm:$0xff]
    %v1361 = vld [vmem:[#allocation8 + $0x1b0] sm:$0xff]
    %v1362 = vld [vmem:[#allocation8 + $0x1b8] sm:$0xff]
    %v1363 = vld [vmem:[#allocation8 + $0x1c0] sm:$0xff]
    %v1364 = vld [vmem:[#allocation8 + $0x1c8] sm:$0xff]
    %v1365 = vld [vmem:[#allocation8 + $0x1d0] sm:$0xff]
    %v1366 = vld [vmem:[#allocation8 + $0x1d8] sm:$0xff]
    %v1367 = vld [vmem:[#allocation8 + $0x1e0] sm:$0xff]
    %v1368 = vld [vmem:[#allocation8 + $0x1e8] sm:$0xff]
    %v1369 = vld [vmem:[#allocation8 + $0x1f0] sm:$0xff]
    %v1370 = vld [vmem:[#allocation8 + $0x1f8] sm:$0xff]
    %v1371 = vld [vmem:[#allocation8 + $0x200] sm:$0xff]
    %v1372 = vld [vmem:[#allocation8 + $0x208] sm:$0xff]
    %v1373 = vld [vmem:[#allocation8 + $0x210] sm:$0xff]
    %v1374 = vld [vmem:[#allocation8 + $0x218] sm:$0xff]
    %v1375 = vld [vmem:[#allocation8 + $0x220] sm:$0xff]
    %v1376 = vld [vmem:[#allocation8 + $0x228] sm:$0xff]
    %v1377 = vld [vmem:[#allocation8 + $0x230] sm:$0xff]
    %v1378 = vld [vmem:[#allocation8 + $0x238] sm:$0xff]
    %v1379 = vld [vmem:[#allocation8 + $0x240] sm:$0xff]
    %v1380 = vld [vmem:[#allocation8 + $0x248] sm:$0xff]
    %v1381 = vld [vmem:[#allocation8 + $0x250] sm:$0xff]
    %v1382 = vld [vmem:[#allocation8 + $0x258] sm:$0xff]
    %v1383 = vld [vmem:[#allocation8 + $0x260] sm:$0xff]
    %v1384 = vld [vmem:[#allocation8 + $0x268] sm:$0xff]
    %v1385 = vld [vmem:[#allocation8 + $0x270] sm:$0xff]
    %v1386 = vld [vmem:[#allocation8 + $0x278] sm:$0xff]
    %v1387 = vld [vmem:[#allocation8 + $0x280] sm:$0xff]
    %v1388 = vld [vmem:[#allocation8 + $0x288] sm:$0xff]
    %v1389 = vld [vmem:[#allocation8 + $0x290] sm:$0xff]
    %v1390 = vld [vmem:[#allocation8 + $0x298] sm:$0xff]
    %v1391 = vld [vmem:[#allocation8 + $0x2a0] sm:$0xff]
    %v1392 = vld [vmem:[#allocation8 + $0x2a8] sm:$0xff]
    %v1393 = vld [vmem:[#allocation8 + $0x2b0] sm:$0xff]
    %v1394 = vld [vmem:[#allocation8 + $0x2b8] sm:$0xff]
    %v1395 = vld [vmem:[#allocation8 + $0x2c0] sm:$0xff]
    %v1396 = vld [vmem:[#allocation8 + $0x2c8] sm:$0xff]
    %v1397 = vld [vmem:[#allocation8 + $0x2d0] sm:$0xff]
    %v1398 = vld [vmem:[#allocation8 + $0x2d8] sm:$0xff]
    %v1399 = vld [vmem:[#allocation8 + $0x2e0] sm:$0xff]
    %v1400 = vld [vmem:[#allocation8 + $0x2e8] sm:$0xff]
    %v1401 = vld [vmem:[#allocation8 + $0x2f0] sm:$0xff]
    %v1402 = vld [vmem:[#allocation8 + $0x2f8] sm:$0xff]
    %v1403 = vld [vmem:[#allocation8 + $0x300] sm:$0xff]
    %v1404 = vld [vmem:[#allocation8 + $0x308] sm:$0xff]
    %v1405 = vld [vmem:[#allocation8 + $0x310] sm:$0xff]
    %v1406 = vld [vmem:[#allocation8 + $0x318] sm:$0xff]
    %v1407 = vld [vmem:[#allocation8 + $0x320] sm:$0xff]
    %v1408 = vld [vmem:[#allocation8 + $0x328] sm:$0xff]
    %v1409 = vld [vmem:[#allocation8 + $0x330] sm:$0xff]
    %v1410 = vld [vmem:[#allocation8 + $0x338] sm:$0xff]
    %v1411 = vld [vmem:[#allocation8 + $0x340] sm:$0xff]
    %v1412 = vld [vmem:[#allocation8 + $0x348] sm:$0xff]
    %v1413 = vld [vmem:[#allocation8 + $0x350] sm:$0xff]
    %v1414 = vld [vmem:[#allocation8 + $0x358] sm:$0xff]
    %v1415 = vld [vmem:[#allocation8 + $0x360] sm:$0xff]
    %v1416 = vld [vmem:[#allocation8 + $0x368] sm:$0xff]
    %v1417 = vld [vmem:[#allocation8 + $0x370] sm:$0xff]
    %v1418 = vld [vmem:[#allocation8 + $0x378] sm:$0xff]
    %v1419 = vld [vmem:[#allocation8 + $0x380] sm:$0xff]
    %v1420 = vld [vmem:[#allocation8 + $0x388] sm:$0xff]
    %v1421 = vld [vmem:[#allocation8 + $0x390] sm:$0xff]
    %v1422 = vld [vmem:[#allocation8 + $0x398] sm:$0xff]
    %v1423 = vld [vmem:[#allocation8 + $0x3a0] sm:$0xff]
    %v1424 = vld [vmem:[#allocation8 + $0x3a8] sm:$0xff]
    %v1425 = vld [vmem:[#allocation8 + $0x3b0] sm:$0xff]
    %v1426 = vld [vmem:[#allocation8 + $0x3b8] sm:$0xff]
    %v1427 = vld [vmem:[#allocation8 + $0x3c0] sm:$0xff]
    %v1428 = vld [vmem:[#allocation8 + $0x3c8] sm:$0xff]
    %v1429 = vld [vmem:[#allocation8 + $0x3d0] sm:$0xff]
    %v1430 = vld [vmem:[#allocation8 + $0x3d8] sm:$0xff]
    %v1431 = vld [vmem:[#allocation8 + $0x3e0] sm:$0xff]
    %v1432 = vld [vmem:[#allocation8 + $0x3e8] sm:$0xff]
    %v1433 = vld [vmem:[#allocation8 + $0x3f0] sm:$0xff]
    %v1434 = vld [vmem:[#allocation8 + $0x3f8] sm:$0xff]
    %v1435 = vld [vmem:[#allocation8 + $0x400] sm:$0xff]
    %v1436 = vld [vmem:[#allocation8 + $0x408] sm:$0xff]
    %v1437 = vld [vmem:[#allocation8 + $0x410] sm:$0xff]
    %v1438 = vld [vmem:[#allocation8 + $0x418] sm:$0xff]
    %v1439 = vld [vmem:[#allocation8 + $0x420] sm:$0xff]
    %v1440 = vld [vmem:[#allocation8 + $0x428] sm:$0xff]
    %v1441 = vld [vmem:[#allocation8 + $0x430] sm:$0xff]
    %v1442 = vld [vmem:[#allocation8 + $0x438] sm:$0xff]
    %v1443 = vld [vmem:[#allocation8 + $0x440] sm:$0xff]
    %v1444 = vld [vmem:[#allocation8 + $0x448] sm:$0xff]
    %v1445 = vld [vmem:[#allocation8 + $0x450] sm:$0xff]
    %v1446 = vld [vmem:[#allocation8 + $0x458] sm:$0xff]
    %v1447 = vld [vmem:[#allocation8 + $0x460] sm:$0xff]
    %v1448 = vld [vmem:[#allocation8 + $0x468] sm:$0xff]
    %v1449 = vld [vmem:[#allocation8 + $0x470] sm:$0xff]
    %v1450 = vld [vmem:[#allocation8 + $0x478] sm:$0xff]
    %v1451 = vld [vmem:[#allocation8 + $0x480] sm:$0xff]
    %v1452 = vld [vmem:[#allocation8 + $0x488] sm:$0xff]
    %v1453 = vld [vmem:[#allocation8 + $0x490] sm:$0xff]
    %v1454 = vld [vmem:[#allocation8 + $0x498] sm:$0xff]
    %v1455 = vld [vmem:[#allocation8 + $0x4a0] sm:$0xff]
    %v1456 = vld [vmem:[#allocation8 + $0x4a8] sm:$0xff]
    %v1457 = vld [vmem:[#allocation8 + $0x4b0] sm:$0xff]
    %v1458 = vld [vmem:[#allocation8 + $0x4b8] sm:$0xff]
    %v1459 = vld [vmem:[#allocation8 + $0x4c0] sm:$0xff]
    %v1460 = vld [vmem:[#allocation8 + $0x4c8] sm:$0xff]
    %v1461 = vld [vmem:[#allocation8 + $0x4d0] sm:$0xff]
    %v1462 = vld [vmem:[#allocation8 + $0x4d8] sm:$0xff]
    %v1463 = vld [vmem:[#allocation8 + $0x4e0] sm:$0xff]
    %v1464 = vld [vmem:[#allocation8 + $0x4e8] sm:$0xff]
    %v1465 = vld [vmem:[#allocation8 + $0x4f0] sm:$0xff]
    %v1466 = vld [vmem:[#allocation8 + $0x4f8] sm:$0xff]
    %v1467 = vld [vmem:[#allocation8 + $0x500] sm:$0xff]
    %v1468 = vld [vmem:[#allocation8 + $0x508] sm:$0xff]
    %v1469 = vld [vmem:[#allocation8 + $0x510] sm:$0xff]
    %v1470 = vld [vmem:[#allocation8 + $0x518] sm:$0xff]
    %v1471 = vld [vmem:[#allocation8 + $0x520] sm:$0xff]
    %v1472 = vld [vmem:[#allocation8 + $0x528] sm:$0xff]
    %v1473 = vld [vmem:[#allocation8 + $0x530] sm:$0xff]
    %v1474 = vld [vmem:[#allocation8 + $0x538] sm:$0xff]
    %v1475 = vld [vmem:[#allocation8 + $0x540] sm:$0xff]
    %v1476 = vld [vmem:[#allocation8 + $0x548] sm:$0xff]
    %v1477 = vld [vmem:[#allocation8 + $0x550] sm:$0xff]
    %v1478 = vld [vmem:[#allocation8 + $0x558] sm:$0xff]
    %v1479 = vld [vmem:[#allocation8 + $0x560] sm:$0xff]
    %v1480 = vld [vmem:[#allocation8 + $0x568] sm:$0xff]
    %v1481 = vld [vmem:[#allocation8 + $0x570] sm:$0xff]
    %v1482 = vld [vmem:[#allocation8 + $0x578] sm:$0xff]
    %v1483 = vld [vmem:[#allocation8 + $0x580] sm:$0xff]
    %v1484 = vld [vmem:[#allocation8 + $0x588] sm:$0xff]
    %v1485 = vld [vmem:[#allocation8 + $0x590] sm:$0xff]
    %v1486 = vld [vmem:[#allocation8 + $0x598] sm:$0xff]
    %v1487 = vld [vmem:[#allocation8 + $0x5a0] sm:$0xff]
    %v1488 = vld [vmem:[#allocation8 + $0x5a8] sm:$0xff]
    %v1489 = vld [vmem:[#allocation8 + $0x5b0] sm:$0xff]
    %v1490 = vld [vmem:[#allocation8 + $0x5b8] sm:$0xff]
    %v1491 = vld [vmem:[#allocation8 + $0x5c0] sm:$0xff]
    %v1492 = vld [vmem:[#allocation8 + $0x5c8] sm:$0xff]
    %v1493 = vld [vmem:[#allocation8 + $0x5d0] sm:$0xff]
    %v1494 = vld [vmem:[#allocation8 + $0x5d8] sm:$0xff]
    %v1495 = vld [vmem:[#allocation8 + $0x5e0] sm:$0xff]
    %v1496 = vld [vmem:[#allocation8 + $0x5e8] sm:$0xff]
    %v1497 = vld [vmem:[#allocation8 + $0x5f0] sm:$0xff]
    %v1498 = vld [vmem:[#allocation8 + $0x5f8] sm:$0xff]
    %v1499 = vld [vmem:[#allocation8 + $0x600] sm:$0xff]
    %v1500 = vld [vmem:[#allocation8 + $0x608] sm:$0xff]
    %v1501 = vld [vmem:[#allocation8 + $0x610] sm:$0xff]
    %v1502 = vld [vmem:[#allocation8 + $0x618] sm:$0xff]
    %v1503 = vld [vmem:[#allocation8 + $0x620] sm:$0xff]
    %v1504 = vld [vmem:[#allocation8 + $0x628] sm:$0xff]
    %v1505 = vld [vmem:[#allocation8 + $0x630] sm:$0xff]
    %v1506 = vld [vmem:[#allocation8 + $0x638] sm:$0xff]
    %v1507 = vld [vmem:[#allocation8 + $0x640] sm:$0xff]
    %v1508 = vld [vmem:[#allocation8 + $0x648] sm:$0xff]
    %v1509 = vld [vmem:[#allocation8 + $0x650] sm:$0xff]
    %v1510 = vld [vmem:[#allocation8 + $0x658] sm:$0xff]
    %v1511 = vld [vmem:[#allocation8 + $0x660] sm:$0xff]
    %v1512 = vld [vmem:[#allocation8 + $0x668] sm:$0xff]
    %v1513 = vld [vmem:[#allocation8 + $0x670] sm:$0xff]
    %v1514 = vld [vmem:[#allocation8 + $0x678] sm:$0xff]
    %v1515 = vld [vmem:[#allocation8 + $0x680] sm:$0xff]
    %v1516 = vld [vmem:[#allocation8 + $0x688] sm:$0xff]
    %v1517 = vld [vmem:[#allocation8 + $0x690] sm:$0xff]
    %v1518 = vld [vmem:[#allocation8 + $0x698] sm:$0xff]
    %v1519 = vld [vmem:[#allocation8 + $0x6a0] sm:$0xff]
    %v1520 = vld [vmem:[#allocation8 + $0x6a8] sm:$0xff]
    %v1521 = vld [vmem:[#allocation8 + $0x6b0] sm:$0xff]
    %v1522 = vld [vmem:[#allocation8 + $0x6b8] sm:$0xff]
    %v1523 = vld [vmem:[#allocation8 + $0x6c0] sm:$0xff]
    %v1524 = vld [vmem:[#allocation8 + $0x6c8] sm:$0xff]
    %v1525 = vld [vmem:[#allocation8 + $0x6d0] sm:$0xff]
    %v1526 = vld [vmem:[#allocation8 + $0x6d8] sm:$0xff]
    %v1527 = vld [vmem:[#allocation8 + $0x6e0] sm:$0xff]
    %v1528 = vld [vmem:[#allocation8 + $0x6e8] sm:$0xff]
    %v1529 = vld [vmem:[#allocation8 + $0x6f0] sm:$0xff]
    %v1530 = vld [vmem:[#allocation8 + $0x6f8] sm:$0xff]
    %v1531 = vld [vmem:[#allocation8 + $0x700] sm:$0xff]
    %v1532 = vld [vmem:[#allocation8 + $0x708] sm:$0xff]
    %v1533 = vld [vmem:[#allocation8 + $0x710] sm:$0xff]
    %v1534 = vld [vmem:[#allocation8 + $0x718] sm:$0xff]
    %v1535 = vld [vmem:[#allocation8 + $0x720] sm:$0xff]
    %v1536 = vld [vmem:[#allocation8 + $0x728] sm:$0xff]
    %v1537 = vld [vmem:[#allocation8 + $0x730] sm:$0xff]
    %v1538 = vld [vmem:[#allocation8 + $0x738] sm:$0xff]
    %v1539 = vld [vmem:[#allocation8 + $0x740] sm:$0xff]
    %v1540 = vld [vmem:[#allocation8 + $0x748] sm:$0xff]
    %v1541 = vld [vmem:[#allocation8 + $0x750] sm:$0xff]
    %v1542 = vld [vmem:[#allocation8 + $0x758] sm:$0xff]
    %v1543 = vld [vmem:[#allocation8 + $0x760] sm:$0xff]
    %v1544 = vld [vmem:[#allocation8 + $0x768] sm:$0xff]
    %v1545 = vld [vmem:[#allocation8 + $0x770] sm:$0xff]
    %v1546 = vld [vmem:[#allocation8 + $0x778] sm:$0xff]
    %v1547 = vld [vmem:[#allocation8 + $0x780] sm:$0xff]
    %v1548 = vld [vmem:[#allocation8 + $0x788] sm:$0xff]
    %v1549 = vld [vmem:[#allocation8 + $0x790] sm:$0xff]
    %v1550 = vld [vmem:[#allocation8 + $0x798] sm:$0xff]
    %v1551 = vld [vmem:[#allocation8 + $0x7a0] sm:$0xff]
    %v1552 = vld [vmem:[#allocation8 + $0x7a8] sm:$0xff]
    %v1553 = vld [vmem:[#allocation8 + $0x7b0] sm:$0xff]
    %v1554 = vld [vmem:[#allocation8 + $0x7b8] sm:$0xff]
    %v1555 = vld [vmem:[#allocation8 + $0x7c0] sm:$0xff]
    %v1556 = vld [vmem:[#allocation8 + $0x7c8] sm:$0xff]
    %v1557 = vld [vmem:[#allocation8 + $0x7d0] sm:$0xff]
    %v1558 = vld [vmem:[#allocation8 + $0x7d8] sm:$0xff]
    %v1559 = vld [vmem:[#allocation8 + $0x7e0] sm:$0xff]
    %v1560 = vld [vmem:[#allocation8 + $0x7e8] sm:$0xff]
    %v1561 = vld [vmem:[#allocation8 + $0x7f0] sm:$0xff]
    %v1562 = vld [vmem:[#allocation8 + $0x7f8] sm:$0xff]
    %v1563 = vld [vmem:[#allocation10] sm:$0xff]
    %v1564 = vld [vmem:[#allocation10 + $0x8] sm:$0xff]
    %v1567 = vlaneseq
    %v1568 = vshrl.u32 %v1567, 7
    %v1569 = vsub.s32 0, %v1568
    %v1570 = vrot.slane %v1563, %v1569
    %v1571 = vlaneseq
    %v1572 = vshrl.u32 %v1571, 7
    %v1573 = vsub.s32 1, %v1572
    %v1574 = vrot.slane %v1563, %v1573
    %v1575 = vlaneseq
    %v1576 = vshrl.u32 %v1575, 7
    %v1577 = vsub.s32 2, %v1576
    %v1578 = vrot.slane %v1563, %v1577
    %v1579 = vlaneseq
    %v1580 = vshrl.u32 %v1579, 7
    %v1581 = vsub.s32 3, %v1580
    %v1582 = vrot.slane %v1563, %v1581
    %v1583 = vlaneseq
    %v1584 = vshrl.u32 %v1583, 7
    %v1585 = vsub.s32 4, %v1584
    %v1586 = vrot.slane %v1563, %v1585
    %v1587 = vlaneseq
    %v1588 = vshrl.u32 %v1587, 7
    %v1589 = vsub.s32 5, %v1588
    %v1590 = vrot.slane %v1563, %v1589
    %v1591 = vlaneseq
    %v1592 = vshrl.u32 %v1591, 7
    %v1593 = vsub.s32 6, %v1592
    %v1594 = vrot.slane %v1563, %v1593
    %v1595 = vlaneseq
    %v1596 = vshrl.u32 %v1595, 7
    %v1597 = vsub.s32 7, %v1596
    %v1598 = vrot.slane %v1563, %v1597
    %v1599 = vlaneseq
    %v1600 = vshrl.u32 %v1599, 7
    %v1601 = vsub.s32 0, %v1600
    %v1602 = vrot.slane %v1564, %v1601
    %v1603 = vlaneseq
    %v1604 = vshrl.u32 %v1603, 7
    %v1605 = vsub.s32 1, %v1604
    %v1606 = vrot.slane %v1564, %v1605
    %v1607 = vlaneseq
    %v1608 = vshrl.u32 %v1607, 7
    %v1609 = vsub.s32 2, %v1608
    %v1610 = vrot.slane %v1564, %v1609
    %v1611 = vlaneseq
    %v1612 = vshrl.u32 %v1611, 7
    %v1613 = vsub.s32 3, %v1612
    %v1614 = vrot.slane %v1564, %v1613
    %v1615 = vlaneseq
    %v1616 = vshrl.u32 %v1615, 7
    %v1617 = vsub.s32 4, %v1616
    %v1618 = vrot.slane %v1564, %v1617
    %v1619 = vlaneseq
    %v1620 = vshrl.u32 %v1619, 7
    %v1621 = vsub.s32 5, %v1620
    %v1622 = vrot.slane %v1564, %v1621
    %v1623 = vlaneseq
    %v1624 = vshrl.u32 %v1623, 7
    %v1625 = vsub.s32 6, %v1624
    %v1626 = vrot.slane %v1564, %v1625
    %v1627 = vlaneseq
    %v1628 = vshrl.u32 %v1627, 7
    %v1629 = vsub.s32 7, %v1628
    %v1630 = vrot.slane %v1564, %v1629
    %v1903 = vunpack.c.l.b16 %v1307
    %v1904 = vunpack.c.h.b16 %v1307
    %v1905 = vunpack.c.l.b16 %v1308
    %v1906 = vunpack.c.h.b16 %v1308
    %v1907 = vunpack.c.l.b16 %v1309
    %v1908 = vunpack.c.h.b16 %v1309
    %v1909 = vunpack.c.l.b16 %v1310
    %v1910 = vunpack.c.h.b16 %v1310
    %v1911 = vunpack.c.l.b16 %v1311
    %v1912 = vunpack.c.h.b16 %v1311
    %v1913 = vunpack.c.l.b16 %v1312
    %v1914 = vunpack.c.h.b16 %v1312
    %v1915 = vunpack.c.l.b16 %v1313
    %v1916 = vunpack.c.h.b16 %v1313
    %v1917 = vunpack.c.l.b16 %v1314
    %v1918 = vunpack.c.h.b16 %v1314
    %v1919 = vunpack.c.l.b16 %v1315
    %v1920 = vunpack.c.h.b16 %v1315
    %v1921 = vunpack.c.l.b16 %v1316
    %v1922 = vunpack.c.h.b16 %v1316
    %v1923 = vunpack.c.l.b16 %v1317
    %v1924 = vunpack.c.h.b16 %v1317
    %v1925 = vunpack.c.l.b16 %v1318
    %v1926 = vunpack.c.h.b16 %v1318
    %v1927 = vunpack.c.l.b16 %v1319
    %v1928 = vunpack.c.h.b16 %v1319
    %v1929 = vunpack.c.l.b16 %v1320
    %v1930 = vunpack.c.h.b16 %v1320
    %v1931 = vunpack.c.l.b16 %v1321
    %v1932 = vunpack.c.h.b16 %v1321
    %v1933 = vunpack.c.l.b16 %v1322
    %v1934 = vunpack.c.h.b16 %v1322
    %v1935 = vunpack.c.l.b16 %v1323
    %v1936 = vunpack.c.h.b16 %v1323
    %v1937 = vunpack.c.l.b16 %v1324
    %v1938 = vunpack.c.h.b16 %v1324
    %v1939 = vunpack.c.l.b16 %v1325
    %v1940 = vunpack.c.h.b16 %v1325
    %v1941 = vunpack.c.l.b16 %v1326
    %v1942 = vunpack.c.h.b16 %v1326
    %v1943 = vunpack.c.l.b16 %v1327
    %v1944 = vunpack.c.h.b16 %v1327
    %v1945 = vunpack.c.l.b16 %v1328
    %v1946 = vunpack.c.h.b16 %v1328
    %v1947 = vunpack.c.l.b16 %v1329
    %v1948 = vunpack.c.h.b16 %v1329
    %v1949 = vunpack.c.l.b16 %v1330
    %v1950 = vunpack.c.h.b16 %v1330
    %v1951 = vunpack.c.l.b16 %v1331
    %v1952 = vunpack.c.h.b16 %v1331
    %v1953 = vunpack.c.l.b16 %v1332
    %v1954 = vunpack.c.h.b16 %v1332
    %v1955 = vunpack.c.l.b16 %v1333
    %v1956 = vunpack.c.h.b16 %v1333
    %v1957 = vunpack.c.l.b16 %v1334
    %v1958 = vunpack.c.h.b16 %v1334
    %v1959 = vunpack.c.l.b16 %v1335
    %v1960 = vunpack.c.h.b16 %v1335
    %v1961 = vunpack.c.l.b16 %v1336
    %v1962 = vunpack.c.h.b16 %v1336
    %v1963 = vunpack.c.l.b16 %v1337
    %v1964 = vunpack.c.h.b16 %v1337
    %v1965 = vunpack.c.l.b16 %v1338
    %v1966 = vunpack.c.h.b16 %v1338
    %v1967 = vunpack.c.l.b16 %v1339
    %v1968 = vunpack.c.h.b16 %v1339
    %v1969 = vunpack.c.l.b16 %v1340
    %v1970 = vunpack.c.h.b16 %v1340
    %v1971 = vunpack.c.l.b16 %v1341
    %v1972 = vunpack.c.h.b16 %v1341
    %v1973 = vunpack.c.l.b16 %v1342
    %v1974 = vunpack.c.h.b16 %v1342
    %v1975 = vunpack.c.l.b16 %v1343
    %v1976 = vunpack.c.h.b16 %v1343
    %v1977 = vunpack.c.l.b16 %v1344
    %v1978 = vunpack.c.h.b16 %v1344
    %v1979 = vunpack.c.l.b16 %v1345
    %v1980 = vunpack.c.h.b16 %v1345
    %v1981 = vunpack.c.l.b16 %v1346
    %v1982 = vunpack.c.h.b16 %v1346
    %v1983 = vunpack.c.l.b16 %v1347
    %v1984 = vunpack.c.h.b16 %v1347
    %v1985 = vunpack.c.l.b16 %v1348
    %v1986 = vunpack.c.h.b16 %v1348
    %v1987 = vunpack.c.l.b16 %v1349
    %v1988 = vunpack.c.h.b16 %v1349
    %v1989 = vunpack.c.l.b16 %v1350
    %v1990 = vunpack.c.h.b16 %v1350
    %v1991 = vunpack.c.l.b16 %v1351
    %v1992 = vunpack.c.h.b16 %v1351
    %v1993 = vunpack.c.l.b16 %v1352
    %v1994 = vunpack.c.h.b16 %v1352
    %v1995 = vunpack.c.l.b16 %v1353
    %v1996 = vunpack.c.h.b16 %v1353
    %v1997 = vunpack.c.l.b16 %v1354
    %v1998 = vunpack.c.h.b16 %v1354
    %v1999 = vunpack.c.l.b16 %v1355
    %v2000 = vunpack.c.h.b16 %v1355
    %v2001 = vunpack.c.l.b16 %v1356
    %v2002 = vunpack.c.h.b16 %v1356
    %v2003 = vunpack.c.l.b16 %v1357
    %v2004 = vunpack.c.h.b16 %v1357
    %v2005 = vunpack.c.l.b16 %v1358
    %v2006 = vunpack.c.h.b16 %v1358
    %v2007 = vunpack.c.l.b16 %v1359
    %v2008 = vunpack.c.h.b16 %v1359
    %v2009 = vunpack.c.l.b16 %v1360
    %v2010 = vunpack.c.h.b16 %v1360
    %v2011 = vunpack.c.l.b16 %v1361
    %v2012 = vunpack.c.h.b16 %v1361
    %v2013 = vunpack.c.l.b16 %v1362
    %v2014 = vunpack.c.h.b16 %v1362
    %v2015 = vunpack.c.l.b16 %v1363
    %v2016 = vunpack.c.h.b16 %v1363
    %v2017 = vunpack.c.l.b16 %v1364
    %v2018 = vunpack.c.h.b16 %v1364
    %v2019 = vunpack.c.l.b16 %v1365
    %v2020 = vunpack.c.h.b16 %v1365
    %v2021 = vunpack.c.l.b16 %v1366
    %v2022 = vunpack.c.h.b16 %v1366
    %v2023 = vunpack.c.l.b16 %v1367
    %v2024 = vunpack.c.h.b16 %v1367
    %v2025 = vunpack.c.l.b16 %v1368
    %v2026 = vunpack.c.h.b16 %v1368
    %v2027 = vunpack.c.l.b16 %v1369
    %v2028 = vunpack.c.h.b16 %v1369
    %v2029 = vunpack.c.l.b16 %v1370
    %v2030 = vunpack.c.h.b16 %v1370
    %v2031 = vunpack.c.l.b16 %v1371
    %v2032 = vunpack.c.h.b16 %v1371
    %v2033 = vunpack.c.l.b16 %v1372
    %v2034 = vunpack.c.h.b16 %v1372
    %v2035 = vunpack.c.l.b16 %v1373
    %v2036 = vunpack.c.h.b16 %v1373
    %v2037 = vunpack.c.l.b16 %v1374
    %v2038 = vunpack.c.h.b16 %v1374
    %v2039 = vunpack.c.l.b16 %v1375
    %v2040 = vunpack.c.h.b16 %v1375
    %v2041 = vunpack.c.l.b16 %v1376
    %v2042 = vunpack.c.h.b16 %v1376
    %v2043 = vunpack.c.l.b16 %v1377
    %v2044 = vunpack.c.h.b16 %v1377
    %v2045 = vunpack.c.l.b16 %v1378
    %v2046 = vunpack.c.h.b16 %v1378
    %v2047 = vunpack.c.l.b16 %v1379
    %v2048 = vunpack.c.h.b16 %v1379
    %v2049 = vunpack.c.l.b16 %v1380
    %v2050 = vunpack.c.h.b16 %v1380
    %v2051 = vunpack.c.l.b16 %v1381
    %v2052 = vunpack.c.h.b16 %v1381
    %v2053 = vunpack.c.l.b16 %v1382
    %v2054 = vunpack.c.h.b16 %v1382
    %v2055 = vunpack.c.l.b16 %v1383
    %v2056 = vunpack.c.h.b16 %v1383
    %v2057 = vunpack.c.l.b16 %v1384
    %v2058 = vunpack.c.h.b16 %v1384
    %v2059 = vunpack.c.l.b16 %v1385
    %v2060 = vunpack.c.h.b16 %v1385
    %v2061 = vunpack.c.l.b16 %v1386
    %v2062 = vunpack.c.h.b16 %v1386
    %v2063 = vunpack.c.l.b16 %v1387
    %v2064 = vunpack.c.h.b16 %v1387
    %v2065 = vunpack.c.l.b16 %v1388
    %v2066 = vunpack.c.h.b16 %v1388
    %v2067 = vunpack.c.l.b16 %v1389
    %v2068 = vunpack.c.h.b16 %v1389
    %v2069 = vunpack.c.l.b16 %v1390
    %v2070 = vunpack.c.h.b16 %v1390
    %v2071 = vunpack.c.l.b16 %v1391
    %v2072 = vunpack.c.h.b16 %v1391
    %v2073 = vunpack.c.l.b16 %v1392
    %v2074 = vunpack.c.h.b16 %v1392
    %v2075 = vunpack.c.l.b16 %v1393
    %v2076 = vunpack.c.h.b16 %v1393
    %v2077 = vunpack.c.l.b16 %v1394
    %v2078 = vunpack.c.h.b16 %v1394
    %v2079 = vunpack.c.l.b16 %v1395
    %v2080 = vunpack.c.h.b16 %v1395
    %v2081 = vunpack.c.l.b16 %v1396
    %v2082 = vunpack.c.h.b16 %v1396
    %v2083 = vunpack.c.l.b16 %v1397
    %v2084 = vunpack.c.h.b16 %v1397
    %v2085 = vunpack.c.l.b16 %v1398
    %v2086 = vunpack.c.h.b16 %v1398
    %v2087 = vunpack.c.l.b16 %v1399
    %v2088 = vunpack.c.h.b16 %v1399
    %v2089 = vunpack.c.l.b16 %v1400
    %v2090 = vunpack.c.h.b16 %v1400
    %v2091 = vunpack.c.l.b16 %v1401
    %v2092 = vunpack.c.h.b16 %v1401
    %v2093 = vunpack.c.l.b16 %v1402
    %v2094 = vunpack.c.h.b16 %v1402
    %v2095 = vunpack.c.l.b16 %v1403
    %v2096 = vunpack.c.h.b16 %v1403
    %v2097 = vunpack.c.l.b16 %v1404
    %v2098 = vunpack.c.h.b16 %v1404
    %v2099 = vunpack.c.l.b16 %v1405
    %v2100 = vunpack.c.h.b16 %v1405
    %v2101 = vunpack.c.l.b16 %v1406
    %v2102 = vunpack.c.h.b16 %v1406
    %v2103 = vunpack.c.l.b16 %v1407
    %v2104 = vunpack.c.h.b16 %v1407
    %v2105 = vunpack.c.l.b16 %v1408
    %v2106 = vunpack.c.h.b16 %v1408
    %v2107 = vunpack.c.l.b16 %v1409
    %v2108 = vunpack.c.h.b16 %v1409
    %v2109 = vunpack.c.l.b16 %v1410
    %v2110 = vunpack.c.h.b16 %v1410
    %v2111 = vunpack.c.l.b16 %v1411
    %v2112 = vunpack.c.h.b16 %v1411
    %v2113 = vunpack.c.l.b16 %v1412
    %v2114 = vunpack.c.h.b16 %v1412
    %v2115 = vunpack.c.l.b16 %v1413
    %v2116 = vunpack.c.h.b16 %v1413
    %v2117 = vunpack.c.l.b16 %v1414
    %v2118 = vunpack.c.h.b16 %v1414
    %v2119 = vunpack.c.l.b16 %v1415
    %v2120 = vunpack.c.h.b16 %v1415
    %v2121 = vunpack.c.l.b16 %v1416
    %v2122 = vunpack.c.h.b16 %v1416
    %v2123 = vunpack.c.l.b16 %v1417
    %v2124 = vunpack.c.h.b16 %v1417
    %v2125 = vunpack.c.l.b16 %v1418
    %v2126 = vunpack.c.h.b16 %v1418
    %v2127 = vunpack.c.l.b16 %v1419
    %v2128 = vunpack.c.h.b16 %v1419
    %v2129 = vunpack.c.l.b16 %v1420
    %v2130 = vunpack.c.h.b16 %v1420
    %v2131 = vunpack.c.l.b16 %v1421
    %v2132 = vunpack.c.h.b16 %v1421
    %v2133 = vunpack.c.l.b16 %v1422
    %v2134 = vunpack.c.h.b16 %v1422
    %v2135 = vunpack.c.l.b16 %v1423
    %v2136 = vunpack.c.h.b16 %v1423
    %v2137 = vunpack.c.l.b16 %v1424
    %v2138 = vunpack.c.h.b16 %v1424
    %v2139 = vunpack.c.l.b16 %v1425
    %v2140 = vunpack.c.h.b16 %v1425
    %v2141 = vunpack.c.l.b16 %v1426
    %v2142 = vunpack.c.h.b16 %v1426
    %v2143 = vunpack.c.l.b16 %v1427
    %v2144 = vunpack.c.h.b16 %v1427
    %v2145 = vunpack.c.l.b16 %v1428
    %v2146 = vunpack.c.h.b16 %v1428
    %v2147 = vunpack.c.l.b16 %v1429
    %v2148 = vunpack.c.h.b16 %v1429
    %v2149 = vunpack.c.l.b16 %v1430
    %v2150 = vunpack.c.h.b16 %v1430
    %v2151 = vunpack.c.l.b16 %v1431
    %v2152 = vunpack.c.h.b16 %v1431
    %v2153 = vunpack.c.l.b16 %v1432
    %v2154 = vunpack.c.h.b16 %v1432
    %v2155 = vunpack.c.l.b16 %v1433
    %v2156 = vunpack.c.h.b16 %v1433
    %v2157 = vunpack.c.l.b16 %v1434
    %v2158 = vunpack.c.h.b16 %v1434
    %v2159 = vunpack.c.l.b16 %v1435
    %v2160 = vunpack.c.h.b16 %v1435
    %v2161 = vunpack.c.l.b16 %v1436
    %v2162 = vunpack.c.h.b16 %v1436
    %v2163 = vunpack.c.l.b16 %v1437
    %v2164 = vunpack.c.h.b16 %v1437
    %v2165 = vunpack.c.l.b16 %v1438
    %v2166 = vunpack.c.h.b16 %v1438
    %v2167 = vunpack.c.l.b16 %v1439
    %v2168 = vunpack.c.h.b16 %v1439
    %v2169 = vunpack.c.l.b16 %v1440
    %v2170 = vunpack.c.h.b16 %v1440
    %v2171 = vunpack.c.l.b16 %v1441
    %v2172 = vunpack.c.h.b16 %v1441
    %v2173 = vunpack.c.l.b16 %v1442
    %v2174 = vunpack.c.h.b16 %v1442
    %v2175 = vunpack.c.l.b16 %v1443
    %v2176 = vunpack.c.h.b16 %v1443
    %v2177 = vunpack.c.l.b16 %v1444
    %v2178 = vunpack.c.h.b16 %v1444
    %v2179 = vunpack.c.l.b16 %v1445
    %v2180 = vunpack.c.h.b16 %v1445
    %v2181 = vunpack.c.l.b16 %v1446
    %v2182 = vunpack.c.h.b16 %v1446
    %v2183 = vunpack.c.l.b16 %v1447
    %v2184 = vunpack.c.h.b16 %v1447
    %v2185 = vunpack.c.l.b16 %v1448
    %v2186 = vunpack.c.h.b16 %v1448
    %v2187 = vunpack.c.l.b16 %v1449
    %v2188 = vunpack.c.h.b16 %v1449
    %v2189 = vunpack.c.l.b16 %v1450
    %v2190 = vunpack.c.h.b16 %v1450
    %v2191 = vunpack.c.l.b16 %v1451
    %v2192 = vunpack.c.h.b16 %v1451
    %v2193 = vunpack.c.l.b16 %v1452
    %v2194 = vunpack.c.h.b16 %v1452
    %v2195 = vunpack.c.l.b16 %v1453
    %v2196 = vunpack.c.h.b16 %v1453
    %v2197 = vunpack.c.l.b16 %v1454
    %v2198 = vunpack.c.h.b16 %v1454
    %v2199 = vunpack.c.l.b16 %v1455
    %v2200 = vunpack.c.h.b16 %v1455
    %v2201 = vunpack.c.l.b16 %v1456
    %v2202 = vunpack.c.h.b16 %v1456
    %v2203 = vunpack.c.l.b16 %v1457
    %v2204 = vunpack.c.h.b16 %v1457
    %v2205 = vunpack.c.l.b16 %v1458
    %v2206 = vunpack.c.h.b16 %v1458
    %v2207 = vunpack.c.l.b16 %v1459
    %v2208 = vunpack.c.h.b16 %v1459
    %v2209 = vunpack.c.l.b16 %v1460
    %v2210 = vunpack.c.h.b16 %v1460
    %v2211 = vunpack.c.l.b16 %v1461
    %v2212 = vunpack.c.h.b16 %v1461
    %v2213 = vunpack.c.l.b16 %v1462
    %v2214 = vunpack.c.h.b16 %v1462
    %v2215 = vunpack.c.l.b16 %v1463
    %v2216 = vunpack.c.h.b16 %v1463
    %v2217 = vunpack.c.l.b16 %v1464
    %v2218 = vunpack.c.h.b16 %v1464
    %v2219 = vunpack.c.l.b16 %v1465
    %v2220 = vunpack.c.h.b16 %v1465
    %v2221 = vunpack.c.l.b16 %v1466
    %v2222 = vunpack.c.h.b16 %v1466
    %v2223 = vunpack.c.l.b16 %v1467
    %v2224 = vunpack.c.h.b16 %v1467
    %v2225 = vunpack.c.l.b16 %v1468
    %v2226 = vunpack.c.h.b16 %v1468
    %v2227 = vunpack.c.l.b16 %v1469
    %v2228 = vunpack.c.h.b16 %v1469
    %v2229 = vunpack.c.l.b16 %v1470
    %v2230 = vunpack.c.h.b16 %v1470
    %v2231 = vunpack.c.l.b16 %v1471
    %v2232 = vunpack.c.h.b16 %v1471
    %v2233 = vunpack.c.l.b16 %v1472
    %v2234 = vunpack.c.h.b16 %v1472
    %v2235 = vunpack.c.l.b16 %v1473
    %v2236 = vunpack.c.h.b16 %v1473
    %v2237 = vunpack.c.l.b16 %v1474
    %v2238 = vunpack.c.h.b16 %v1474
    %v2239 = vunpack.c.l.b16 %v1475
    %v2240 = vunpack.c.h.b16 %v1475
    %v2241 = vunpack.c.l.b16 %v1476
    %v2242 = vunpack.c.h.b16 %v1476
    %v2243 = vunpack.c.l.b16 %v1477
    %v2244 = vunpack.c.h.b16 %v1477
    %v2245 = vunpack.c.l.b16 %v1478
    %v2246 = vunpack.c.h.b16 %v1478
    %v2247 = vunpack.c.l.b16 %v1479
    %v2248 = vunpack.c.h.b16 %v1479
    %v2249 = vunpack.c.l.b16 %v1480
    %v2250 = vunpack.c.h.b16 %v1480
    %v2251 = vunpack.c.l.b16 %v1481
    %v2252 = vunpack.c.h.b16 %v1481
    %v2253 = vunpack.c.l.b16 %v1482
    %v2254 = vunpack.c.h.b16 %v1482
    %v2255 = vunpack.c.l.b16 %v1483
    %v2256 = vunpack.c.h.b16 %v1483
    %v2257 = vunpack.c.l.b16 %v1484
    %v2258 = vunpack.c.h.b16 %v1484
    %v2259 = vunpack.c.l.b16 %v1485
    %v2260 = vunpack.c.h.b16 %v1485
    %v2261 = vunpack.c.l.b16 %v1486
    %v2262 = vunpack.c.h.b16 %v1486
    %v2263 = vunpack.c.l.b16 %v1487
    %v2264 = vunpack.c.h.b16 %v1487
    %v2265 = vunpack.c.l.b16 %v1488
    %v2266 = vunpack.c.h.b16 %v1488
    %v2267 = vunpack.c.l.b16 %v1489
    %v2268 = vunpack.c.h.b16 %v1489
    %v2269 = vunpack.c.l.b16 %v1490
    %v2270 = vunpack.c.h.b16 %v1490
    %v2271 = vunpack.c.l.b16 %v1491
    %v2272 = vunpack.c.h.b16 %v1491
    %v2273 = vunpack.c.l.b16 %v1492
    %v2274 = vunpack.c.h.b16 %v1492
    %v2275 = vunpack.c.l.b16 %v1493
    %v2276 = vunpack.c.h.b16 %v1493
    %v2277 = vunpack.c.l.b16 %v1494
    %v2278 = vunpack.c.h.b16 %v1494
    %v2279 = vunpack.c.l.b16 %v1495
    %v2280 = vunpack.c.h.b16 %v1495
    %v2281 = vunpack.c.l.b16 %v1496
    %v2282 = vunpack.c.h.b16 %v1496
    %v2283 = vunpack.c.l.b16 %v1497
    %v2284 = vunpack.c.h.b16 %v1497
    %v2285 = vunpack.c.l.b16 %v1498
    %v2286 = vunpack.c.h.b16 %v1498
    %v2287 = vunpack.c.l.b16 %v1499
    %v2288 = vunpack.c.h.b16 %v1499
    %v2289 = vunpack.c.l.b16 %v1500
    %v2290 = vunpack.c.h.b16 %v1500
    %v2291 = vunpack.c.l.b16 %v1501
    %v2292 = vunpack.c.h.b16 %v1501
    %v2293 = vunpack.c.l.b16 %v1502
    %v2294 = vunpack.c.h.b16 %v1502
    %v2295 = vunpack.c.l.b16 %v1503
    %v2296 = vunpack.c.h.b16 %v1503
    %v2297 = vunpack.c.l.b16 %v1504
    %v2298 = vunpack.c.h.b16 %v1504
    %v2299 = vunpack.c.l.b16 %v1505
    %v2300 = vunpack.c.h.b16 %v1505
    %v2301 = vunpack.c.l.b16 %v1506
    %v2302 = vunpack.c.h.b16 %v1506
    %v2303 = vunpack.c.l.b16 %v1507
    %v2304 = vunpack.c.h.b16 %v1507
    %v2305 = vunpack.c.l.b16 %v1508
    %v2306 = vunpack.c.h.b16 %v1508
    %v2307 = vunpack.c.l.b16 %v1509
    %v2308 = vunpack.c.h.b16 %v1509
    %v2309 = vunpack.c.l.b16 %v1510
    %v2310 = vunpack.c.h.b16 %v1510
    %v2311 = vunpack.c.l.b16 %v1511
    %v2312 = vunpack.c.h.b16 %v1511
    %v2313 = vunpack.c.l.b16 %v1512
    %v2314 = vunpack.c.h.b16 %v1512
    %v2315 = vunpack.c.l.b16 %v1513
    %v2316 = vunpack.c.h.b16 %v1513
    %v2317 = vunpack.c.l.b16 %v1514
    %v2318 = vunpack.c.h.b16 %v1514
    %v2319 = vunpack.c.l.b16 %v1515
    %v2320 = vunpack.c.h.b16 %v1515
    %v2321 = vunpack.c.l.b16 %v1516
    %v2322 = vunpack.c.h.b16 %v1516
    %v2323 = vunpack.c.l.b16 %v1517
    %v2324 = vunpack.c.h.b16 %v1517
    %v2325 = vunpack.c.l.b16 %v1518
    %v2326 = vunpack.c.h.b16 %v1518
    %v2327 = vunpack.c.l.b16 %v1519
    %v2328 = vunpack.c.h.b16 %v1519
    %v2329 = vunpack.c.l.b16 %v1520
    %v2330 = vunpack.c.h.b16 %v1520
    %v2331 = vunpack.c.l.b16 %v1521
    %v2332 = vunpack.c.h.b16 %v1521
    %v2333 = vunpack.c.l.b16 %v1522
    %v2334 = vunpack.c.h.b16 %v1522
    %v2335 = vunpack.c.l.b16 %v1523
    %v2336 = vunpack.c.h.b16 %v1523
    %v2337 = vunpack.c.l.b16 %v1524
    %v2338 = vunpack.c.h.b16 %v1524
    %v2339 = vunpack.c.l.b16 %v1525
    %v2340 = vunpack.c.h.b16 %v1525
    %v2341 = vunpack.c.l.b16 %v1526
    %v2342 = vunpack.c.h.b16 %v1526
    %v2343 = vunpack.c.l.b16 %v1527
    %v2344 = vunpack.c.h.b16 %v1527
    %v2345 = vunpack.c.l.b16 %v1528
    %v2346 = vunpack.c.h.b16 %v1528
    %v2347 = vunpack.c.l.b16 %v1529
    %v2348 = vunpack.c.h.b16 %v1529
    %v2349 = vunpack.c.l.b16 %v1530
    %v2350 = vunpack.c.h.b16 %v1530
    %v2351 = vunpack.c.l.b16 %v1531
    %v2352 = vunpack.c.h.b16 %v1531
    %v2353 = vunpack.c.l.b16 %v1532
    %v2354 = vunpack.c.h.b16 %v1532
    %v2355 = vunpack.c.l.b16 %v1533
    %v2356 = vunpack.c.h.b16 %v1533
    %v2357 = vunpack.c.l.b16 %v1534
    %v2358 = vunpack.c.h.b16 %v1534
    %v2359 = vunpack.c.l.b16 %v1535
    %v2360 = vunpack.c.h.b16 %v1535
    %v2361 = vunpack.c.l.b16 %v1536
    %v2362 = vunpack.c.h.b16 %v1536
    %v2363 = vunpack.c.l.b16 %v1537
    %v2364 = vunpack.c.h.b16 %v1537
    %v2365 = vunpack.c.l.b16 %v1538
    %v2366 = vunpack.c.h.b16 %v1538
    %v2367 = vunpack.c.l.b16 %v1539
    %v2368 = vunpack.c.h.b16 %v1539
    %v2369 = vunpack.c.l.b16 %v1540
    %v2370 = vunpack.c.h.b16 %v1540
    %v2371 = vunpack.c.l.b16 %v1541
    %v2372 = vunpack.c.h.b16 %v1541
    %v2373 = vunpack.c.l.b16 %v1542
    %v2374 = vunpack.c.h.b16 %v1542
    %v2375 = vunpack.c.l.b16 %v1543
    %v2376 = vunpack.c.h.b16 %v1543
    %v2377 = vunpack.c.l.b16 %v1544
    %v2378 = vunpack.c.h.b16 %v1544
    %v2379 = vunpack.c.l.b16 %v1545
    %v2380 = vunpack.c.h.b16 %v1545
    %v2381 = vunpack.c.l.b16 %v1546
    %v2382 = vunpack.c.h.b16 %v1546
    %v2383 = vunpack.c.l.b16 %v1547
    %v2384 = vunpack.c.h.b16 %v1547
    %v2385 = vunpack.c.l.b16 %v1548
    %v2386 = vunpack.c.h.b16 %v1548
    %v2387 = vunpack.c.l.b16 %v1549
    %v2388 = vunpack.c.h.b16 %v1549
    %v2389 = vunpack.c.l.b16 %v1550
    %v2390 = vunpack.c.h.b16 %v1550
    %v2391 = vunpack.c.l.b16 %v1551
    %v2392 = vunpack.c.h.b16 %v1551
    %v2393 = vunpack.c.l.b16 %v1552
    %v2394 = vunpack.c.h.b16 %v1552
    %v2395 = vunpack.c.l.b16 %v1553
    %v2396 = vunpack.c.h.b16 %v1553
    %v2397 = vunpack.c.l.b16 %v1554
    %v2398 = vunpack.c.h.b16 %v1554
    %v2399 = vunpack.c.l.b16 %v1555
    %v2400 = vunpack.c.h.b16 %v1555
    %v2401 = vunpack.c.l.b16 %v1556
    %v2402 = vunpack.c.h.b16 %v1556
    %v2403 = vunpack.c.l.b16 %v1557
    %v2404 = vunpack.c.h.b16 %v1557
    %v2405 = vunpack.c.l.b16 %v1558
    %v2406 = vunpack.c.h.b16 %v1558
    %v2407 = vunpack.c.l.b16 %v1559
    %v2408 = vunpack.c.h.b16 %v1559
    %v2409 = vunpack.c.l.b16 %v1560
    %v2410 = vunpack.c.h.b16 %v1560
    %v2411 = vunpack.c.l.b16 %v1561
    %v2412 = vunpack.c.h.b16 %v1561
    %v2413 = vunpack.c.l.b16 %v1562
    %v2414 = vunpack.c.h.b16 %v1562
    %v2415 = vpack.c.b16 %v1919, %v1903
    %v2416 = vpack.c.b16 %v1920, %v1904
    %v2417 = vpack.c.b16 %v1921, %v1905
    %v2418 = vpack.c.b16 %v1922, %v1906
    %v2419 = vpack.c.b16 %v1923, %v1907
    %v2420 = vpack.c.b16 %v1924, %v1908
    %v2421 = vpack.c.b16 %v1925, %v1909
    %v2422 = vpack.c.b16 %v1926, %v1910
    %v2423 = vpack.c.b16 %v1927, %v1911
    %v2424 = vpack.c.b16 %v1928, %v1912
    %v2425 = vpack.c.b16 %v1929, %v1913
    %v2426 = vpack.c.b16 %v1930, %v1914
    %v2427 = vpack.c.b16 %v1931, %v1915
    %v2428 = vpack.c.b16 %v1932, %v1916
    %v2429 = vpack.c.b16 %v1933, %v1917
    %v2430 = vpack.c.b16 %v1934, %v1918
    %v2431 = vpack.c.b16 %v1951, %v1935
    %v2432 = vpack.c.b16 %v1952, %v1936
    %v2433 = vpack.c.b16 %v1953, %v1937
    %v2434 = vpack.c.b16 %v1954, %v1938
    %v2435 = vpack.c.b16 %v1955, %v1939
    %v2436 = vpack.c.b16 %v1956, %v1940
    %v2437 = vpack.c.b16 %v1957, %v1941
    %v2438 = vpack.c.b16 %v1958, %v1942
    %v2439 = vpack.c.b16 %v1959, %v1943
    %v2440 = vpack.c.b16 %v1960, %v1944
    %v2441 = vpack.c.b16 %v1961, %v1945
    %v2442 = vpack.c.b16 %v1962, %v1946
    %v2443 = vpack.c.b16 %v1963, %v1947
    %v2444 = vpack.c.b16 %v1964, %v1948
    %v2445 = vpack.c.b16 %v1965, %v1949
    %v2446 = vpack.c.b16 %v1966, %v1950
    %v2447 = vpack.c.b16 %v1983, %v1967
    %v2448 = vpack.c.b16 %v1984, %v1968
    %v2449 = vpack.c.b16 %v1985, %v1969
    %v2450 = vpack.c.b16 %v1986, %v1970
    %v2451 = vpack.c.b16 %v1987, %v1971
    %v2452 = vpack.c.b16 %v1988, %v1972
    %v2453 = vpack.c.b16 %v1989, %v1973
    %v2454 = vpack.c.b16 %v1990, %v1974
    %v2455 = vpack.c.b16 %v1991, %v1975
    %v2456 = vpack.c.b16 %v1992, %v1976
    %v2457 = vpack.c.b16 %v1993, %v1977
    %v2458 = vpack.c.b16 %v1994, %v1978
    %v2459 = vpack.c.b16 %v1995, %v1979
    %v2460 = vpack.c.b16 %v1996, %v1980
    %v2461 = vpack.c.b16 %v1997, %v1981
    %v2462 = vpack.c.b16 %v1998, %v1982
    %v2463 = vpack.c.b16 %v2015, %v1999
    %v2464 = vpack.c.b16 %v2016, %v2000
    %v2465 = vpack.c.b16 %v2017, %v2001
    %v2466 = vpack.c.b16 %v2018, %v2002
    %v2467 = vpack.c.b16 %v2019, %v2003
    %v2468 = vpack.c.b16 %v2020, %v2004
    %v2469 = vpack.c.b16 %v2021, %v2005
    %v2470 = vpack.c.b16 %v2022, %v2006
    %v2471 = vpack.c.b16 %v2023, %v2007
    %v2472 = vpack.c.b16 %v2024, %v2008
    %v2473 = vpack.c.b16 %v2025, %v2009
    %v2474 = vpack.c.b16 %v2026, %v2010
    %v2475 = vpack.c.b16 %v2027, %v2011
    %v2476 = vpack.c.b16 %v2028, %v2012
    %v2477 = vpack.c.b16 %v2029, %v2013
    %v2478 = vpack.c.b16 %v2030, %v2014
    %v2479 = vpack.c.b16 %v2047, %v2031
    %v2480 = vpack.c.b16 %v2048, %v2032
    %v2481 = vpack.c.b16 %v2049, %v2033
    %v2482 = vpack.c.b16 %v2050, %v2034
    %v2483 = vpack.c.b16 %v2051, %v2035
    %v2484 = vpack.c.b16 %v2052, %v2036
    %v2485 = vpack.c.b16 %v2053, %v2037
    %v2486 = vpack.c.b16 %v2054, %v2038
    %v2487 = vpack.c.b16 %v2055, %v2039
    %v2488 = vpack.c.b16 %v2056, %v2040
    %v2489 = vpack.c.b16 %v2057, %v2041
    %v2490 = vpack.c.b16 %v2058, %v2042
    %v2491 = vpack.c.b16 %v2059, %v2043
    %v2492 = vpack.c.b16 %v2060, %v2044
    %v2493 = vpack.c.b16 %v2061, %v2045
    %v2494 = vpack.c.b16 %v2062, %v2046
    %v2495 = vpack.c.b16 %v2079, %v2063
    %v2496 = vpack.c.b16 %v2080, %v2064
    %v2497 = vpack.c.b16 %v2081, %v2065
    %v2498 = vpack.c.b16 %v2082, %v2066
    %v2499 = vpack.c.b16 %v2083, %v2067
    %v2500 = vpack.c.b16 %v2084, %v2068
    %v2501 = vpack.c.b16 %v2085, %v2069
    %v2502 = vpack.c.b16 %v2086, %v2070
    %v2503 = vpack.c.b16 %v2087, %v2071
    %v2504 = vpack.c.b16 %v2088, %v2072
    %v2505 = vpack.c.b16 %v2089, %v2073
    %v2506 = vpack.c.b16 %v2090, %v2074
    %v2507 = vpack.c.b16 %v2091, %v2075
    %v2508 = vpack.c.b16 %v2092, %v2076
    %v2509 = vpack.c.b16 %v2093, %v2077
    %v2510 = vpack.c.b16 %v2094, %v2078
    %v2511 = vpack.c.b16 %v2111, %v2095
    %v2512 = vpack.c.b16 %v2112, %v2096
    %v2513 = vpack.c.b16 %v2113, %v2097
    %v2514 = vpack.c.b16 %v2114, %v2098
    %v2515 = vpack.c.b16 %v2115, %v2099
    %v2516 = vpack.c.b16 %v2116, %v2100
    %v2517 = vpack.c.b16 %v2117, %v2101
    %v2518 = vpack.c.b16 %v2118, %v2102
    %v2519 = vpack.c.b16 %v2119, %v2103
    %v2520 = vpack.c.b16 %v2120, %v2104
    %v2521 = vpack.c.b16 %v2121, %v2105
    %v2522 = vpack.c.b16 %v2122, %v2106
    %v2523 = vpack.c.b16 %v2123, %v2107
    %v2524 = vpack.c.b16 %v2124, %v2108
    %v2525 = vpack.c.b16 %v2125, %v2109
    %v2526 = vpack.c.b16 %v2126, %v2110
    %v2527 = vpack.c.b16 %v2143, %v2127
    %v2528 = vpack.c.b16 %v2144, %v2128
    %v2529 = vpack.c.b16 %v2145, %v2129
    %v2530 = vpack.c.b16 %v2146, %v2130
    %v2531 = vpack.c.b16 %v2147, %v2131
    %v2532 = vpack.c.b16 %v2148, %v2132
    %v2533 = vpack.c.b16 %v2149, %v2133
    %v2534 = vpack.c.b16 %v2150, %v2134
    %v2535 = vpack.c.b16 %v2151, %v2135
    %v2536 = vpack.c.b16 %v2152, %v2136
    %v2537 = vpack.c.b16 %v2153, %v2137
    %v2538 = vpack.c.b16 %v2154, %v2138
    %v2539 = vpack.c.b16 %v2155, %v2139
    %v2540 = vpack.c.b16 %v2156, %v2140
    %v2541 = vpack.c.b16 %v2157, %v2141
    %v2542 = vpack.c.b16 %v2158, %v2142
    %v2543 = vpack.c.b16 %v2175, %v2159
    %v2544 = vpack.c.b16 %v2176, %v2160
    %v2545 = vpack.c.b16 %v2177, %v2161
    %v2546 = vpack.c.b16 %v2178, %v2162
    %v2547 = vpack.c.b16 %v2179, %v2163
    %v2548 = vpack.c.b16 %v2180, %v2164
    %v2549 = vpack.c.b16 %v2181, %v2165
    %v2550 = vpack.c.b16 %v2182, %v2166
    %v2551 = vpack.c.b16 %v2183, %v2167
    %v2552 = vpack.c.b16 %v2184, %v2168
    %v2553 = vpack.c.b16 %v2185, %v2169
    %v2554 = vpack.c.b16 %v2186, %v2170
    %v2555 = vpack.c.b16 %v2187, %v2171
    %v2556 = vpack.c.b16 %v2188, %v2172
    %v2557 = vpack.c.b16 %v2189, %v2173
    %v2558 = vpack.c.b16 %v2190, %v2174
    %v2559 = vpack.c.b16 %v2207, %v2191
    %v2560 = vpack.c.b16 %v2208, %v2192
    %v2561 = vpack.c.b16 %v2209, %v2193
    %v2562 = vpack.c.b16 %v2210, %v2194
    %v2563 = vpack.c.b16 %v2211, %v2195
    %v2564 = vpack.c.b16 %v2212, %v2196
    %v2565 = vpack.c.b16 %v2213, %v2197
    %v2566 = vpack.c.b16 %v2214, %v2198
    %v2567 = vpack.c.b16 %v2215, %v2199
    %v2568 = vpack.c.b16 %v2216, %v2200
    %v2569 = vpack.c.b16 %v2217, %v2201
    %v2570 = vpack.c.b16 %v2218, %v2202
    %v2571 = vpack.c.b16 %v2219, %v2203
    %v2572 = vpack.c.b16 %v2220, %v2204
    %v2573 = vpack.c.b16 %v2221, %v2205
    %v2574 = vpack.c.b16 %v2222, %v2206
    %v2575 = vpack.c.b16 %v2239, %v2223
    %v2576 = vpack.c.b16 %v2240, %v2224
    %v2577 = vpack.c.b16 %v2241, %v2225
    %v2578 = vpack.c.b16 %v2242, %v2226
    %v2579 = vpack.c.b16 %v2243, %v2227
    %v2580 = vpack.c.b16 %v2244, %v2228
    %v2581 = vpack.c.b16 %v2245, %v2229
    %v2582 = vpack.c.b16 %v2246, %v2230
    %v2583 = vpack.c.b16 %v2247, %v2231
    %v2584 = vpack.c.b16 %v2248, %v2232
    %v2585 = vpack.c.b16 %v2249, %v2233
    %v2586 = vpack.c.b16 %v2250, %v2234
    %v2587 = vpack.c.b16 %v2251, %v2235
    %v2588 = vpack.c.b16 %v2252, %v2236
    %v2589 = vpack.c.b16 %v2253, %v2237
    %v2590 = vpack.c.b16 %v2254, %v2238
    %v2591 = vpack.c.b16 %v2271, %v2255
    %v2592 = vpack.c.b16 %v2272, %v2256
    %v2593 = vpack.c.b16 %v2273, %v2257
    %v2594 = vpack.c.b16 %v2274, %v2258
    %v2595 = vpack.c.b16 %v2275, %v2259
    %v2596 = vpack.c.b16 %v2276, %v2260
    %v2597 = vpack.c.b16 %v2277, %v2261
    %v2598 = vpack.c.b16 %v2278, %v2262
    %v2599 = vpack.c.b16 %v2279, %v2263
    %v2600 = vpack.c.b16 %v2280, %v2264
    %v2601 = vpack.c.b16 %v2281, %v2265
    %v2602 = vpack.c.b16 %v2282, %v2266
    %v2603 = vpack.c.b16 %v2283, %v2267
    %v2604 = vpack.c.b16 %v2284, %v2268
    %v2605 = vpack.c.b16 %v2285, %v2269
    %v2606 = vpack.c.b16 %v2286, %v2270
    %v2607 = vpack.c.b16 %v2303, %v2287
    %v2608 = vpack.c.b16 %v2304, %v2288
    %v2609 = vpack.c.b16 %v2305, %v2289
    %v2610 = vpack.c.b16 %v2306, %v2290
    %v2611 = vpack.c.b16 %v2307, %v2291
    %v2612 = vpack.c.b16 %v2308, %v2292
    %v2613 = vpack.c.b16 %v2309, %v2293
    %v2614 = vpack.c.b16 %v2310, %v2294
    %v2615 = vpack.c.b16 %v2311, %v2295
    %v2616 = vpack.c.b16 %v2312, %v2296
    %v2617 = vpack.c.b16 %v2313, %v2297
    %v2618 = vpack.c.b16 %v2314, %v2298
    %v2619 = vpack.c.b16 %v2315, %v2299
    %v2620 = vpack.c.b16 %v2316, %v2300
    %v2621 = vpack.c.b16 %v2317, %v2301
    %v2622 = vpack.c.b16 %v2318, %v2302
    %v2623 = vpack.c.b16 %v2335, %v2319
    %v2624 = vpack.c.b16 %v2336, %v2320
    %v2625 = vpack.c.b16 %v2337, %v2321
    %v2626 = vpack.c.b16 %v2338, %v2322
    %v2627 = vpack.c.b16 %v2339, %v2323
    %v2628 = vpack.c.b16 %v2340, %v2324
    %v2629 = vpack.c.b16 %v2341, %v2325
    %v2630 = vpack.c.b16 %v2342, %v2326
    %v2631 = vpack.c.b16 %v2343, %v2327
    %v2632 = vpack.c.b16 %v2344, %v2328
    %v2633 = vpack.c.b16 %v2345, %v2329
    %v2634 = vpack.c.b16 %v2346, %v2330
    %v2635 = vpack.c.b16 %v2347, %v2331
    %v2636 = vpack.c.b16 %v2348, %v2332
    %v2637 = vpack.c.b16 %v2349, %v2333
    %v2638 = vpack.c.b16 %v2350, %v2334
    %v2639 = vpack.c.b16 %v2367, %v2351
    %v2640 = vpack.c.b16 %v2368, %v2352
    %v2641 = vpack.c.b16 %v2369, %v2353
    %v2642 = vpack.c.b16 %v2370, %v2354
    %v2643 = vpack.c.b16 %v2371, %v2355
    %v2644 = vpack.c.b16 %v2372, %v2356
    %v2645 = vpack.c.b16 %v2373, %v2357
    %v2646 = vpack.c.b16 %v2374, %v2358
    %v2647 = vpack.c.b16 %v2375, %v2359
    %v2648 = vpack.c.b16 %v2376, %v2360
    %v2649 = vpack.c.b16 %v2377, %v2361
    %v2650 = vpack.c.b16 %v2378, %v2362
    %v2651 = vpack.c.b16 %v2379, %v2363
    %v2652 = vpack.c.b16 %v2380, %v2364
    %v2653 = vpack.c.b16 %v2381, %v2365
    %v2654 = vpack.c.b16 %v2382, %v2366
    %v2655 = vpack.c.b16 %v2399, %v2383
    %v2656 = vpack.c.b16 %v2400, %v2384
    %v2657 = vpack.c.b16 %v2401, %v2385
    %v2658 = vpack.c.b16 %v2402, %v2386
    %v2659 = vpack.c.b16 %v2403, %v2387
    %v2660 = vpack.c.b16 %v2404, %v2388
    %v2661 = vpack.c.b16 %v2405, %v2389
    %v2662 = vpack.c.b16 %v2406, %v2390
    %v2663 = vpack.c.b16 %v2407, %v2391
    %v2664 = vpack.c.b16 %v2408, %v2392
    %v2665 = vpack.c.b16 %v2409, %v2393
    %v2666 = vpack.c.b16 %v2410, %v2394
    %v2667 = vpack.c.b16 %v2411, %v2395
    %v2668 = vpack.c.b16 %v2412, %v2396
    %v2669 = vpack.c.b16 %v2413, %v2397
    %v2670 = vpack.c.b16 %v2414, %v2398
    %2927 = vmatprep.subr.bf16.mxu0 %v2528
    %2928 = vmatpush1.bf16.msra.mxu0 %v2527
    %2929 = vmatprep.subr.bf16.mxu0 %v2512
    %2930 = vmatpush1.bf16.msra.mxu0 %v2511
    %2931 = vmatprep.subr.bf16.mxu0 %v2496
    %2932 = vmatpush1.bf16.msra.mxu0 %v2495
    %2933 = vmatprep.subr.bf16.mxu0 %v2480
    %2934 = vmatpush1.bf16.msra.mxu0 %v2479
    %2935 = vmatprep.subr.bf16.mxu0 %v2464
    %2936 = vmatpush1.bf16.msra.mxu0 %v2463
    %2937 = vmatprep.subr.bf16.mxu0 %v2448
    %2938 = vmatpush1.bf16.msra.mxu0 %v2447
    %2939 = vmatprep.subr.bf16.mxu0 %v2432
    %2940 = vmatpush1.bf16.msra.mxu0 %v2431
    %2941 = vmatprep.subr.bf16.mxu0 %v2416
    %2942 = vmatpush1.bf16.msra.mxu0 %v2415
    %2943 = vmatprep.subr.bf16.mxu0 %v2656
    %2944 = vmatpush2.bf16.msra.mxu0 %v2655
    %2945 = vmatprep.subr.bf16.mxu0 %v2640
    %2946 = vmatpush2.bf16.msra.mxu0 %v2639
    %2947 = vmatprep.subr.bf16.mxu0 %v2624
    %2948 = vmatpush2.bf16.msra.mxu0 %v2623
    %2949 = vmatprep.subr.bf16.mxu0 %v2608
    %2950 = vmatpush2.bf16.msra.mxu0 %v2607
    %2951 = vmatprep.subr.bf16.mxu0 %v2592
    %2952 = vmatpush2.bf16.msra.mxu0 %v2591
    %2953 = vmatprep.subr.bf16.mxu0 %v2576
    %2954 = vmatpush2.bf16.msra.mxu0 %v2575
    %2955 = vmatprep.subr.bf16.mxu0 %v2560
    %2956 = vmatpush2.bf16.msra.mxu0 %v2559
    %2957 = vmatprep.subr.bf16.mxu0 %v2544
    %2958 = vmatpush2.bf16.msra.mxu0 %v2543
    %2959 = vmatprep.mubr.bf16.mxu0 %v1306
    %2960 = vmatmul.mubr.bf16.gmra.mxu0 %v1305
    %v2961 = vpop.f32.mrf.mxu0
    %v2962 = vadd.f32 %v1570, %v2961
    %v2963 = vpop.f32.mrf.mxu0
    %v2964 = vadd.f32 %v1574, %v2963
    %v2965 = vpop.f32.mrf.mxu0
    %v2966 = vpop.f32.mrf.mxu0
    %2967 = vdwg.mxu0
    %2968 = vmatprep.subr.bf16.mxu0 %v2530
    %2969 = vmatpush1.bf16.msra.mxu0 %v2529
    %2970 = vmatprep.subr.bf16.mxu0 %v2514
    %2971 = vmatpush1.bf16.msra.mxu0 %v2513
    %2972 = vmatprep.subr.bf16.mxu0 %v2498
    %2973 = vmatpush1.bf16.msra.mxu0 %v2497
    %2974 = vmatprep.subr.bf16.mxu0 %v2482
    %2975 = vmatpush1.bf16.msra.mxu0 %v2481
    %2976 = vmatprep.subr.bf16.mxu0 %v2466
    %2977 = vmatpush1.bf16.msra.mxu0 %v2465
    %2978 = vmatprep.subr.bf16.mxu0 %v2450
    %2979 = vmatpush1.bf16.msra.mxu0 %v2449
    %2980 = vmatprep.subr.bf16.mxu0 %v2434
    %2981 = vmatpush1.bf16.msra.mxu0 %v2433
    %2982 = vmatprep.subr.bf16.mxu0 %v2418
    %2983 = vmatpush1.bf16.msra.mxu0 %v2417
    %2984 = vmatprep.subr.bf16.mxu0 %v2658
    %2985 = vmatpush2.bf16.msra.mxu0 %v2657
    %2986 = vmatprep.subr.bf16.mxu0 %v2642
    %2987 = vmatpush2.bf16.msra.mxu0 %v2641
    %2988 = vmatprep.subr.bf16.mxu0 %v2626
    %2989 = vmatpush2.bf16.msra.mxu0 %v2625
    %2990 = vmatprep.subr.bf16.mxu0 %v2610
    %2991 = vmatpush2.bf16.msra.mxu0 %v2609
    %2992 = vmatprep.subr.bf16.mxu0 %v2594
    %2993 = vmatpush2.bf16.msra.mxu0 %v2593
    %2994 = vmatprep.subr.bf16.mxu0 %v2578
    %2995 = vmatpush2.bf16.msra.mxu0 %v2577
    %2996 = vmatprep.subr.bf16.mxu0 %v2562
    %2997 = vmatpush2.bf16.msra.mxu0 %v2561
    %2998 = vmatprep.subr.bf16.mxu0 %v2546
    %2999 = vmatpush2.bf16.msra.mxu0 %v2545
    %3000 = vmatprep.mubr.bf16.mxu0 %v1306
    %3001 = vmatmul.mubr.bf16.gmra.mxu0 %v1305
    %v3002 = vpop.f32.mrf.mxu0
    %v3003 = vadd.f32 %v1578, %v3002
    %v3004 = vpop.f32.mrf.mxu0
    %v3005 = vadd.f32 %v1582, %v3004
    %v3006 = vpop.f32.mrf.mxu0
    %v3007 = vpop.f32.mrf.mxu0
    %3008 = vdwg.mxu0
    %3009 = vmatprep.subr.bf16.mxu0 %v2532
    %3010 = vmatpush1.bf16.msra.mxu0 %v2531
    %3011 = vmatprep.subr.bf16.mxu0 %v2516
    %3012 = vmatpush1.bf16.msra.mxu0 %v2515
    %3013 = vmatprep.subr.bf16.mxu0 %v2500
    %3014 = vmatpush1.bf16.msra.mxu0 %v2499
    %3015 = vmatprep.subr.bf16.mxu0 %v2484
    %3016 = vmatpush1.bf16.msra.mxu0 %v2483
    %3017 = vmatprep.subr.bf16.mxu0 %v2468
    %3018 = vmatpush1.bf16.msra.mxu0 %v2467
    %3019 = vmatprep.subr.bf16.mxu0 %v2452
    %3020 = vmatpush1.bf16.msra.mxu0 %v2451
    %3021 = vmatprep.subr.bf16.mxu0 %v2436
    %3022 = vmatpush1.bf16.msra.mxu0 %v2435
    %3023 = vmatprep.subr.bf16.mxu0 %v2420
    %3024 = vmatpush1.bf16.msra.mxu0 %v2419
    %3025 = vmatprep.subr.bf16.mxu0 %v2660
    %3026 = vmatpush2.bf16.msra.mxu0 %v2659
    %3027 = vmatprep.subr.bf16.mxu0 %v2644
    %3028 = vmatpush2.bf16.msra.mxu0 %v2643
    %3029 = vmatprep.subr.bf16.mxu0 %v2628
    %3030 = vmatpush2.bf16.msra.mxu0 %v2627
    %3031 = vmatprep.subr.bf16.mxu0 %v2612
    %3032 = vmatpush2.bf16.msra.mxu0 %v2611
    %3033 = vmatprep.subr.bf16.mxu0 %v2596
    %3034 = vmatpush2.bf16.msra.mxu0 %v2595
    %3035 = vmatprep.subr.bf16.mxu0 %v2580
    %3036 = vmatpush2.bf16.msra.mxu0 %v2579
    %3037 = vmatprep.subr.bf16.mxu0 %v2564
    %3038 = vmatpush2.bf16.msra.mxu0 %v2563
    %3039 = vmatprep.subr.bf16.mxu0 %v2548
    %3040 = vmatpush2.bf16.msra.mxu0 %v2547
    %3041 = vmatprep.mubr.bf16.mxu0 %v1306
    %3042 = vmatmul.mubr.bf16.gmra.mxu0 %v1305
    %v3043 = vpop.f32.mrf.mxu0
    %v3044 = vadd.f32 %v1586, %v3043
    %v3045 = vpop.f32.mrf.mxu0
    %v3046 = vadd.f32 %v1590, %v3045
    %v3047 = vpop.f32.mrf.mxu0
    %v3048 = vpop.f32.mrf.mxu0
    %3049 = vdwg.mxu0
    %3050 = vmatprep.subr.bf16.mxu0 %v2534
    %3051 = vmatpush1.bf16.msra.mxu0 %v2533
    %3052 = vmatprep.subr.bf16.mxu0 %v2518
    %3053 = vmatpush1.bf16.msra.mxu0 %v2517
    %3054 = vmatprep.subr.bf16.mxu0 %v2502
    %3055 = vmatpush1.bf16.msra.mxu0 %v2501
    %3056 = vmatprep.subr.bf16.mxu0 %v2486
    %3057 = vmatpush1.bf16.msra.mxu0 %v2485
    %3058 = vmatprep.subr.bf16.mxu0 %v2470
    %3059 = vmatpush1.bf16.msra.mxu0 %v2469
    %3060 = vmatprep.subr.bf16.mxu0 %v2454
    %3061 = vmatpush1.bf16.msra.mxu0 %v2453
    %3062 = vmatprep.subr.bf16.mxu0 %v2438
    %3063 = vmatpush1.bf16.msra.mxu0 %v2437
    %3064 = vmatprep.subr.bf16.mxu0 %v2422
    %3065 = vmatpush1.bf16.msra.mxu0 %v2421
    %3066 = vmatprep.subr.bf16.mxu0 %v2662
    %3067 = vmatpush2.bf16.msra.mxu0 %v2661
    %3068 = vmatprep.subr.bf16.mxu0 %v2646
    %3069 = vmatpush2.bf16.msra.mxu0 %v2645
    %3070 = vmatprep.subr.bf16.mxu0 %v2630
    %3071 = vmatpush2.bf16.msra.mxu0 %v2629
    %3072 = vmatprep.subr.bf16.mxu0 %v2614
    %3073 = vmatpush2.bf16.msra.mxu0 %v2613
    %3074 = vmatprep.subr.bf16.mxu0 %v2598
    %3075 = vmatpush2.bf16.msra.mxu0 %v2597
    %3076 = vmatprep.subr.bf16.mxu0 %v2582
    %3077 = vmatpush2.bf16.msra.mxu0 %v2581
    %3078 = vmatprep.subr.bf16.mxu0 %v2566
    %3079 = vmatpush2.bf16.msra.mxu0 %v2565
    %3080 = vmatprep.subr.bf16.mxu0 %v2550
    %3081 = vmatpush2.bf16.msra.mxu0 %v2549
    %3082 = vmatprep.mubr.bf16.mxu0 %v1306
    %3083 = vmatmul.mubr.bf16.gmra.mxu0 %v1305
    %v3084 = vpop.f32.mrf.mxu0
    %v3085 = vadd.f32 %v1594, %v3084
    %v3086 = vpop.f32.mrf.mxu0
    %v3087 = vadd.f32 %v1598, %v3086
    %v3088 = vpop.f32.mrf.mxu0
    %v3089 = vpop.f32.mrf.mxu0
    %3090 = vdwg.mxu0
    %3091 = vmatprep.subr.bf16.mxu0 %v2536
    %3092 = vmatpush1.bf16.msra.mxu0 %v2535
    %3093 = vmatprep.subr.bf16.mxu0 %v2520
    %3094 = vmatpush1.bf16.msra.mxu0 %v2519
    %3095 = vmatprep.subr.bf16.mxu0 %v2504
    %3096 = vmatpush1.bf16.msra.mxu0 %v2503
    %3097 = vmatprep.subr.bf16.mxu0 %v2488
    %3098 = vmatpush1.bf16.msra.mxu0 %v2487
    %3099 = vmatprep.subr.bf16.mxu0 %v2472
    %3100 = vmatpush1.bf16.msra.mxu0 %v2471
    %3101 = vmatprep.subr.bf16.mxu0 %v2456
    %3102 = vmatpush1.bf16.msra.mxu0 %v2455
    %3103 = vmatprep.subr.bf16.mxu0 %v2440
    %3104 = vmatpush1.bf16.msra.mxu0 %v2439
    %3105 = vmatprep.subr.bf16.mxu0 %v2424
    %3106 = vmatpush1.bf16.msra.mxu0 %v2423
    %3107 = vmatprep.subr.bf16.mxu0 %v2664
    %3108 = vmatpush2.bf16.msra.mxu0 %v2663
    %3109 = vmatprep.subr.bf16.mxu0 %v2648
    %3110 = vmatpush2.bf16.msra.mxu0 %v2647
    %3111 = vmatprep.subr.bf16.mxu0 %v2632
    %3112 = vmatpush2.bf16.msra.mxu0 %v2631
    %3113 = vmatprep.subr.bf16.mxu0 %v2616
    %3114 = vmatpush2.bf16.msra.mxu0 %v2615
    %3115 = vmatprep.subr.bf16.mxu0 %v2600
    %3116 = vmatpush2.bf16.msra.mxu0 %v2599
    %3117 = vmatprep.subr.bf16.mxu0 %v2584
    %3118 = vmatpush2.bf16.msra.mxu0 %v2583
    %3119 = vmatprep.subr.bf16.mxu0 %v2568
    %3120 = vmatpush2.bf16.msra.mxu0 %v2567
    %3121 = vmatprep.subr.bf16.mxu0 %v2552
    %3122 = vmatpush2.bf16.msra.mxu0 %v2551
    %3123 = vmatprep.mubr.bf16.mxu0 %v1306
    %3124 = vmatmul.mubr.bf16.gmra.mxu0 %v1305
    %v3125 = vpop.f32.mrf.mxu0
    %v3126 = vadd.f32 %v1602, %v3125
    %v3127 = vpop.f32.mrf.mxu0
    %v3128 = vadd.f32 %v1606, %v3127
    %v3129 = vpop.f32.mrf.mxu0
    %v3130 = vpop.f32.mrf.mxu0
    %3131 = vdwg.mxu0
    %3132 = vmatprep.subr.bf16.mxu0 %v2538
    %3133 = vmatpush1.bf16.msra.mxu0 %v2537
    %3134 = vmatprep.subr.bf16.mxu0 %v2522
    %3135 = vmatpush1.bf16.msra.mxu0 %v2521
    %3136 = vmatprep.subr.bf16.mxu0 %v2506
    %3137 = vmatpush1.bf16.msra.mxu0 %v2505
    %3138 = vmatprep.subr.bf16.mxu0 %v2490
    %3139 = vmatpush1.bf16.msra.mxu0 %v2489
    %3140 = vmatprep.subr.bf16.mxu0 %v2474
    %3141 = vmatpush1.bf16.msra.mxu0 %v2473
    %3142 = vmatprep.subr.bf16.mxu0 %v2458
    %3143 = vmatpush1.bf16.msra.mxu0 %v2457
    %3144 = vmatprep.subr.bf16.mxu0 %v2442
    %3145 = vmatpush1.bf16.msra.mxu0 %v2441
    %3146 = vmatprep.subr.bf16.mxu0 %v2426
    %3147 = vmatpush1.bf16.msra.mxu0 %v2425
    %3148 = vmatprep.subr.bf16.mxu0 %v2666
    %3149 = vmatpush2.bf16.msra.mxu0 %v2665
    %3150 = vmatprep.subr.bf16.mxu0 %v2650
    %3151 = vmatpush2.bf16.msra.mxu0 %v2649
    %3152 = vmatprep.subr.bf16.mxu0 %v2634
    %3153 = vmatpush2.bf16.msra.mxu0 %v2633
    %3154 = vmatprep.subr.bf16.mxu0 %v2618
    %3155 = vmatpush2.bf16.msra.mxu0 %v2617
    %3156 = vmatprep.subr.bf16.mxu0 %v2602
    %3157 = vmatpush2.bf16.msra.mxu0 %v2601
    %3158 = vmatprep.subr.bf16.mxu0 %v2586
    %3159 = vmatpush2.bf16.msra.mxu0 %v2585
    %3160 = vmatprep.subr.bf16.mxu0 %v2570
    %3161 = vmatpush2.bf16.msra.mxu0 %v2569
    %3162 = vmatprep.subr.bf16.mxu0 %v2554
    %3163 = vmatpush2.bf16.msra.mxu0 %v2553
    %3164 = vmatprep.mubr.bf16.mxu0 %v1306
    %3165 = vmatmul.mubr.bf16.gmra.mxu0 %v1305
    %v3166 = vpop.f32.mrf.mxu0
    %v3167 = vadd.f32 %v1610, %v3166
    %v3168 = vpop.f32.mrf.mxu0
    %v3169 = vadd.f32 %v1614, %v3168
    %v3170 = vpop.f32.mrf.mxu0
    %v3171 = vpop.f32.mrf.mxu0
    %3172 = vdwg.mxu0
    %3173 = vmatprep.subr.bf16.mxu0 %v2540
    %3174 = vmatpush1.bf16.msra.mxu0 %v2539
    %3175 = vmatprep.subr.bf16.mxu0 %v2524
    %3176 = vmatpush1.bf16.msra.mxu0 %v2523
    %3177 = vmatprep.subr.bf16.mxu0 %v2508
    %3178 = vmatpush1.bf16.msra.mxu0 %v2507
    %3179 = vmatprep.subr.bf16.mxu0 %v2492
    %3180 = vmatpush1.bf16.msra.mxu0 %v2491
    %3181 = vmatprep.subr.bf16.mxu0 %v2476
    %3182 = vmatpush1.bf16.msra.mxu0 %v2475
    %3183 = vmatprep.subr.bf16.mxu0 %v2460
    %3184 = vmatpush1.bf16.msra.mxu0 %v2459
    %3185 = vmatprep.subr.bf16.mxu0 %v2444
    %3186 = vmatpush1.bf16.msra.mxu0 %v2443
    %3187 = vmatprep.subr.bf16.mxu0 %v2428
    %3188 = vmatpush1.bf16.msra.mxu0 %v2427
    %3189 = vmatprep.subr.bf16.mxu0 %v2668
    %3190 = vmatpush2.bf16.msra.mxu0 %v2667
    %3191 = vmatprep.subr.bf16.mxu0 %v2652
    %3192 = vmatpush2.bf16.msra.mxu0 %v2651
    %3193 = vmatprep.subr.bf16.mxu0 %v2636
    %3194 = vmatpush2.bf16.msra.mxu0 %v2635
    %3195 = vmatprep.subr.bf16.mxu0 %v2620
    %3196 = vmatpush2.bf16.msra.mxu0 %v2619
    %3197 = vmatprep.subr.bf16.mxu0 %v2604
    %3198 = vmatpush2.bf16.msra.mxu0 %v2603
    %3199 = vmatprep.subr.bf16.mxu0 %v2588
    %3200 = vmatpush2.bf16.msra.mxu0 %v2587
    %3201 = vmatprep.subr.bf16.mxu0 %v2572
    %3202 = vmatpush2.bf16.msra.mxu0 %v2571
    %3203 = vmatprep.subr.bf16.mxu0 %v2556
    %3204 = vmatpush2.bf16.msra.mxu0 %v2555
    %3205 = vmatprep.mubr.bf16.mxu0 %v1306
    %3206 = vmatmul.mubr.bf16.gmra.mxu0 %v1305
    %v3207 = vpop.f32.mrf.mxu0
    %v3208 = vadd.f32 %v1618, %v3207
    %v3209 = vpop.f32.mrf.mxu0
    %v3210 = vadd.f32 %v1622, %v3209
    %v3211 = vpop.f32.mrf.mxu0
    %v3212 = vpop.f32.mrf.mxu0
    %3213 = vdwg.mxu0
    %3214 = vmatprep.subr.bf16.mxu0 %v2542
    %3215 = vmatpush1.bf16.msra.mxu0 %v2541
    %3216 = vmatprep.subr.bf16.mxu0 %v2526
    %3217 = vmatpush1.bf16.msra.mxu0 %v2525
    %3218 = vmatprep.subr.bf16.mxu0 %v2510
    %3219 = vmatpush1.bf16.msra.mxu0 %v2509
    %3220 = vmatprep.subr.bf16.mxu0 %v2494
    %3221 = vmatpush1.bf16.msra.mxu0 %v2493
    %3222 = vmatprep.subr.bf16.mxu0 %v2478
    %3223 = vmatpush1.bf16.msra.mxu0 %v2477
    %3224 = vmatprep.subr.bf16.mxu0 %v2462
    %3225 = vmatpush1.bf16.msra.mxu0 %v2461
    %3226 = vmatprep.subr.bf16.mxu0 %v2446
    %3227 = vmatpush1.bf16.msra.mxu0 %v2445
    %3228 = vmatprep.subr.bf16.mxu0 %v2430
    %3229 = vmatpush1.bf16.msra.mxu0 %v2429
    %3230 = vmatprep.subr.bf16.mxu0 %v2670
    %3231 = vmatpush2.bf16.msra.mxu0 %v2669
    %3232 = vmatprep.subr.bf16.mxu0 %v2654
    %3233 = vmatpush2.bf16.msra.mxu0 %v2653
    %3234 = vmatprep.subr.bf16.mxu0 %v2638
    %3235 = vmatpush2.bf16.msra.mxu0 %v2637
    %3236 = vmatprep.subr.bf16.mxu0 %v2622
    %3237 = vmatpush2.bf16.msra.mxu0 %v2621
    %3238 = vmatprep.subr.bf16.mxu0 %v2606
    %3239 = vmatpush2.bf16.msra.mxu0 %v2605
    %3240 = vmatprep.subr.bf16.mxu0 %v2590
    %3241 = vmatpush2.bf16.msra.mxu0 %v2589
    %3242 = vmatprep.subr.bf16.mxu0 %v2574
    %3243 = vmatpush2.bf16.msra.mxu0 %v2573
    %3244 = vmatprep.subr.bf16.mxu0 %v2558
    %3245 = vmatpush2.bf16.msra.mxu0 %v2557
    %3246 = vmatprep.mubr.bf16.mxu0 %v1306
    %3247 = vmatmul.mubr.bf16.gmra.mxu0 %v1305
    %v3248 = vpop.f32.mrf.mxu0
    %v3249 = vadd.f32 %v1626, %v3248
    %v3250 = vpop.f32.mrf.mxu0
    %v3251 = vadd.f32 %v1630, %v3250
    %v3252 = vpop.f32.mrf.mxu0
    %v3253 = vpop.f32.mrf.mxu0
    %3254 = vdwg.mxu0
    %s3255 = smul.u32 0, 1024
    %s3256 = sshra.s32 %s3255, 7
    %s3257 = sand.u32 %s3255, 127
    %s3258 = smul.addr %s3256, 2
    %s3259 = scalar_lea.vmem [#allocation2], %s3258
    %v3260 = vld [vmem:[%s3259] sm:$0xff]
    %v3261 = vld [vmem:[%s3259 + $0x8] sm:$0xff]
    %s3262 = smul.addr %s3256, 2
    %s3263 = scalar_lea.vmem [#allocation5], %s3262
    %v3264 = vld [vmem:[%s3263] sm:$0xff]
    %v3265 = vld [vmem:[%s3263 + $0x8] sm:$0xff]
    %v3266 = vand.u32 2147483647, %v93
    %vm3267 = vcmp.le.f32.partialorder %v3266, 0.7853982
    %vm3268 = vcmp.lt.s32.totalorder %v93, 0
    %v3269 = vand.u32 %v93, 2139095040
    %v3270 = vshrl.u32 %v3269, 23
    %v3271 = vsub.s32 %v3270, 127
    %v3272 = vand.u32 2147483647, %v93
    %v3273 = vand.u32 %v3272, 8388607
    %v3274 = vor.u32 %v3273, 8388608
    %v3275 = vsub.s32 0, %v3274
    %v3276 = vadd.s32 %v3271, 1
    %vm3277 = vcmp.gt.s32.totalorder %v3276, 0
    %v3278 = vsel %vm3277, %v3276, 0
    %v3279 = vshrl.u32 %v3278, 5
    %v3280 = vand.u32 %v3278, 31
    %v3281 = vsub.s32 32, %v3280
    %v3282 = vshrl.u32 683565275, %v3281
    %v3283 = vshll.u32 683565275, %v3280
    %v3284 = vshrl.u32 2475754826, %v3281
    %v3285 = vor.u32 %v3283, %v3284
    %v3286 = vshll.u32 2475754826, %v3280
    %v3287 = vshrl.u32 2131351028, %v3281
    %v3288 = vor.u32 %v3286, %v3287
    %v3289 = vshll.u32 2131351028, %v3280
    %v3290 = vshrl.u32 2102212464, %v3281
    %v3291 = vor.u32 %v3289, %v3290
    %v3292 = vshll.u32 2102212464, %v3280
    %v3293 = vshrl.u32 920167782, %v3281
    %v3294 = vor.u32 %v3292, %v3293
    %v3295 = vshll.u32 920167782, %v3280
    %v3296 = vshrl.u32 1326507024, %v3281
    %v3297 = vor.u32 %v3295, %v3296
    %vm3298 = vcmp.lt.s32.totalorder %v3279, 1
    %vm3299 = vcmp.lt.s32.totalorder %v3279, 2
    %vm3300 = vcmp.lt.s32.totalorder %v3279, 3
    %vm3301 = vcmp.lt.s32.totalorder %v3279, 4
    %v3302 = vsel %vm3298, %v3282, %v3285
    %v3303 = vsel %vm3301, %v3291, 2102212464
    %v3304 = vsel %vm3300, %v3288, %v3303
    %v3305 = vsel %vm3299, %v3302, %v3304
    %v3306 = vsel %vm3298, %v3285, %v3288
    %v3307 = vsel %vm3301, %v3294, 920167782
    %v3308 = vsel %vm3300, %v3291, %v3307
    %v3309 = vsel %vm3299, %v3306, %v3308
    %v3310 = vsel %vm3298, %v3288, %v3291
    %v3311 = vsel %vm3301, %v3297, 1326507024
    %v3312 = vsel %vm3300, %v3294, %v3311
    %v3313 = vsel %vm3299, %v3310, %v3312
    %v3314 = vshll.u32 %v3274, 8
    %v3315 = vmul.u32.u64.compose %v3314, %v3313
    %v3316 = vextract.low.u32 %v3315
    %v3317 = vextract.high.u32 %v3315
    %v3318 = vmul.u32.u64.compose %v3314, %v3309
    %v3319 = vextract.low.u32 %v3318
    %v3320 = vextract.high.u32 %v3318
    %v3321 = vmul.u32 %v3314, %v3305
    %v3322 = vadd.s32 %v3317, %v3319
    %vm3323 = vc.u32 %v3317, %v3319
    %v3324 = vadd.s32 %v3320, 1
    %v3325 = vsel %vm3323, %v3324, %v3320
    %v3326 = vadd.s32 %v3321, %v3325
    %v3327 = vadd.s32 %v3326, 536870912
    %v3328 = vshrl.u32 %v3327, 30
    %v3329 = vshll.u32 %v3328, 30
    %v3330 = vsub.s32 %v3326, %v3329
    %vm3331 = vcmp.lt.s32.totalorder %v3330, 0
    %v3332 = vsub.s32 0, %v3330
    %v3333 = vsel %vm3331, %v3332, %v3330
    %v3334 = vclz %v3333
    %v3335 = vsub.s32 %v3334, 2
    %vm3336 = vcmp.gt.s32.totalorder 0, %v3335
    %v3337 = vsel %vm3336, 0, %v3335
    %v3338 = vsub.s32 32, %v3337
    %v3339 = vshll.u32 %v3330, %v3337
    %v3340 = vshrl.u32 %v3322, %v3338
    %v3341 = vor.u32 %v3339, %v3340
    %v3342 = vsub.s32 4294967266, %v3337
    %v3343 = vadd.s32 %v3342, 127
    %v3344 = vshll.u32 %v3343, 23
    %v3345 = vor.u32 4788187, %v3344
    %v3346 = vand.u32 2147483647, %v3345
    %v3348 = vcvt.s32.f32 %v3341
    %v3349 = vmul.f32 %v3348, %v3346
    %v3350 = vxor.u32 %v3349, 2147483648
    %v3351 = vsel %vm3268, %v3350, %v3349
    %v3352 = vsub.s32 4, %v3328
    %v3353 = vsel %vm3268, %v3352, %v3328
    %v3354 = vsel %vm3267, %v93, %v3351
    %v3355 = vsel %vm3267, 0, %v3353
    %v3356 = vcosq.f32.pop %v3354
    %v3357 = vsinq.f32.pop %v3354
    %vm3358 = vweird.f32 %v93
    %v3359 = vadd.s32 %v3355, 3
    %v3360 = vand.u32 %v3359, 3
    %vm3361 = vcmp.lt.s32.totalorder %v3360, 2
    %vm3362 = vcmp.eq.s32.totalorder %v3360, 0
    %v3363 = vxor.u32 %v3357, 2147483648
    %v3364 = vsel %vm3362, %v3356, %v3363
    %vm3365 = vcmp.eq.s32.totalorder %v3360, 2
    %v3366 = vxor.u32 %v3356, 2147483648
    %v3367 = vsel %vm3365, %v3366, %v3357
    %v3368 = vsel %vm3361, %v3364, %v3367
    %v3369 = vsel %vm3358, nan, %v3368
    %v3370 = vmul.f32 %v3369, -1.5707964
    %3372 = vset.pattern.permute.xlu0 0
    %3373 = vperm.xlu0 %3372, %v3370
    %v3374 = vpop.permute.xlu0 %3373
    %v3378 = vcombine.high %v3260, %v3260
    %v3380 = vunpack.c.l.s4 1983009808
    %v3381 = vunpack.c.0.s8 %v3380
    %v3382 = vlaneseq
    %v3383 = vshrl.u32 %v3382, 7
    %v3384 = vsub.s32 %v3381, %v3383
    %v3385 = vrot.slane %v3260, %v3384
    %v3387 = vunpack.c.l.s4 1983009808
    %v3388 = vunpack.c.0.s8 %v3387
    %v3389 = vlaneseq
    %v3390 = vshrl.u32 %v3389, 7
    %v3391 = vsub.s32 %v3388, %v3390
    %v3392 = vrot.slane %v3378, %v3391
    %v3393 = vcombine.high %v3385, %v3385
    %v3394 = vcombine.high %v3392, %v3392
    %v3395 = vcombine.high %v3261, %v3261
    %v3397 = vunpack.c.l.s4 1983009808
    %v3398 = vunpack.c.0.s8 %v3397
    %v3399 = vlaneseq
    %v3400 = vshrl.u32 %v3399, 7
    %v3401 = vsub.s32 %v3398, %v3400
    %v3402 = vrot.slane %v3261, %v3401
    %v3404 = vunpack.c.l.s4 1983009808
    %v3405 = vunpack.c.0.s8 %v3404
    %v3406 = vlaneseq
    %v3407 = vshrl.u32 %v3406, 7
    %v3408 = vsub.s32 %v3405, %v3407
    %v3409 = vrot.slane %v3395, %v3408
    %v3410 = vcombine.high %v3402, %v3402
    %v3411 = vcombine.high %v3409, %v3409
    %v3420 = vmul.f32 %v3374, %v3385
    %v3421 = vmul.f32 %v3374, %v3393
    %v3422 = vmul.f32 %v3374, %v3392
    %v3423 = vmul.f32 %v3374, %v3394
    %v3424 = vmul.f32 %v3374, %v3402
    %v3425 = vmul.f32 %v3374, %v3410
    %v3426 = vmul.f32 %v3374, %v3409
    %v3427 = vmul.f32 %v3374, %v3411
    %v3428 = vsub.f32 %v3420, %v2962
    %v3429 = vsub.f32 %v3421, %v2964
    %v3430 = vsub.f32 %v3422, %v3003
    %v3431 = vsub.f32 %v3423, %v3005
    %v3432 = vsub.f32 %v3424, %v3044
    %v3433 = vsub.f32 %v3425, %v3046
    %v3434 = vsub.f32 %v3426, %v3085
    %v3435 = vsub.f32 %v3427, %v3087
    %v3444 = vcombine.low %v3126, %v3128
    %v3445 = vcombine.low %v3167, %v3169
    %v3447 = vunpack.c.l.s4 1983009808
    %v3448 = vunpack.c.0.s8 %v3447
    %v3449 = vlaneseq
    %v3450 = vshrl.u32 %v3449, 7
    %v3451 = vsub.s32 %v3448, %v3450
    %v3452 = vrot.slane %v3444, %v3451
    %v3454 = vunpack.c.l.s4 1983009808
    %v3455 = vunpack.c.0.s8 %v3454
    %v3456 = vlaneseq
    %v3457 = vshrl.u32 %v3456, 7
    %v3458 = vsub.s32 %v3455, %v3457
    %v3459 = vrot.slane %v3445, %v3458
    %v3460 = vcombine.low %v3452, %v3459
    %v3461 = vcombine.low %v3208, %v3210
    %v3462 = vcombine.low %v3249, %v3251
    %v3464 = vunpack.c.l.s4 1983009808
    %v3465 = vunpack.c.0.s8 %v3464
    %v3466 = vlaneseq
    %v3467 = vshrl.u32 %v3466, 7
    %v3468 = vsub.s32 %v3465, %v3467
    %v3469 = vrot.slane %v3461, %v3468
    %v3471 = vunpack.c.l.s4 1983009808
    %v3472 = vunpack.c.0.s8 %v3471
    %v3473 = vlaneseq
    %v3474 = vshrl.u32 %v3473, 7
    %v3475 = vsub.s32 %v3472, %v3474
    %v3476 = vrot.slane %v3462, %v3475
    %v3477 = vcombine.low %v3469, %v3476
    %v3480 = vsub.f32 %v3264, %v3460
    %v3481 = vsub.f32 %v3265, %v3477
    %v3482 = vmul.f32 %v3428, %v3428
    %v3483 = vmul.f32 %v3429, %v3429
    %v3484 = vmul.f32 %v3430, %v3430
    %v3485 = vmul.f32 %v3431, %v3431
    %v3486 = vmul.f32 %v3432, %v3432
    %v3487 = vmul.f32 %v3433, %v3433
    %v3488 = vmul.f32 %v3434, %v3434
    %v3489 = vmul.f32 %v3435, %v3435
    %vm3490 = vcmask 1041408
    %v3491 = vsel %vm3490, %v3482, 0.0
    %v3492 = vsel %vm3490, %v3483, 0.0
    %v3493 = vadd.f32 %v3491, %v3492
    %v3494 = vsel %vm3490, %v3484, 0.0
    %v3495 = vadd.f32 %v3493, %v3494
    %v3496 = vsel %vm3490, %v3485, 0.0
    %v3497 = vadd.f32 %v3495, %v3496
    %v3498 = vsel %vm3490, %v3486, 0.0
    %v3499 = vadd.f32 %v3497, %v3498
    %v3500 = vsel %vm3490, %v3487, 0.0
    %v3501 = vadd.f32 %v3499, %v3500
    %v3502 = vsel %vm3490, %v3488, 0.0
    %v3503 = vadd.f32 %v3501, %v3502
    %v3504 = vsel %vm3490, %v3489, 0.0
    %v3505 = vadd.f32 %v3503, %v3504
    %3506 = vadd.xlane.f32.xlu0 %v3505
    %v3507 = vpop.xlane.xlu0 %3506
    %v3508 = vrot.slane %v3507, 4
    %v3509 = vadd.f32 %v3507, %v3508
    %v3510 = vrot.slane %v3509, 2
    %v3511 = vadd.f32 %v3509, %v3510
    %v3512 = vrot.slane %v3511, 1
    %v3513 = vadd.f32 %v3511, %v3512
    %s3514 = vtos %v3513
    %v3515 = vmul.f32 %v3480, %v3480
    %v3516 = vmul.f32 %v3481, %v3481
    %v3519 = vcombine.high %v3515, %v3515
    %v3521 = vunpack.c.l.s4 1983009808
    %v3522 = vunpack.c.0.s8 %v3521
    %v3523 = vlaneseq
    %v3524 = vshrl.u32 %v3523, 7
    %v3525 = vsub.s32 %v3522, %v3524
    %v3526 = vrot.slane %v3515, %v3525
    %v3528 = vunpack.c.l.s4 1983009808
    %v3529 = vunpack.c.0.s8 %v3528
    %v3530 = vlaneseq
    %v3531 = vshrl.u32 %v3530, 7
    %v3532 = vsub.s32 %v3529, %v3531
    %v3533 = vrot.slane %v3519, %v3532
    %v3534 = vcombine.high %v3526, %v3526
    %v3535 = vcombine.high %v3533, %v3533
    %v3536 = vcombine.high %v3516, %v3516
    %v3538 = vunpack.c.l.s4 1983009808
    %v3539 = vunpack.c.0.s8 %v3538
    %v3540 = vlaneseq
    %v3541 = vshrl.u32 %v3540, 7
    %v3542 = vsub.s32 %v3539, %v3541
    %v3543 = vrot.slane %v3516, %v3542
    %v3545 = vunpack.c.l.s4 1983009808
    %v3546 = vunpack.c.0.s8 %v3545
    %v3547 = vlaneseq
    %v3548 = vshrl.u32 %v3547, 7
    %v3549 = vsub.s32 %v3546, %v3548
    %v3550 = vrot.slane %v3536, %v3549
    %v3551 = vcombine.high %v3543, %v3543
    %v3552 = vcombine.high %v3550, %v3550
    %v3561 = vsel %vm3490, %v3526, 0.0
    %v3562 = vsel %vm3490, %v3534, 0.0
    %v3563 = vadd.f32 %v3561, %v3562
    %v3564 = vsel %vm3490, %v3533, 0.0
    %v3565 = vadd.f32 %v3563, %v3564
    %v3566 = vsel %vm3490, %v3535, 0.0
    %v3567 = vadd.f32 %v3565, %v3566
    %v3568 = vsel %vm3490, %v3543, 0.0
    %v3569 = vadd.f32 %v3567, %v3568
    %v3570 = vsel %vm3490, %v3551, 0.0
    %v3571 = vadd.f32 %v3569, %v3570
    %v3572 = vsel %vm3490, %v3550, 0.0
    %v3573 = vadd.f32 %v3571, %v3572
    %v3574 = vsel %vm3490, %v3552, 0.0
    %v3575 = vadd.f32 %v3573, %v3574
    %3576 = vadd.xlane.f32.xlu0 %v3575
    %v3577 = vpop.xlane.xlu0 %3576
    %v3578 = vrot.slane %v3577, 4
    %v3579 = vadd.f32 %v3577, %v3578
    %v3580 = vrot.slane %v3579, 2
    %v3581 = vadd.f32 %v3579, %v3580
    %v3582 = vrot.slane %v3581, 1
    %v3583 = vadd.f32 %v3581, %v3582
    %s3584 = vtos %v3583
    %s3585 = sadd.f32 %s3514, %s3584
    %s3586 = scalar_lea.smem [#allocation11], 0
    %3587 = sst [smem:[%s3586]] %s3585
    // Predicated region
    $region54: #{tpu_custom_call.1} parent=1 // pred_check
      _
    $region55: #{tpu_custom_call.1} parent=1 // pred_check_branch
      %3589 = sbr.rel (0) target = $region57
    $region56: #{tpu_custom_call.1} parent=1 // pred_region
      %s3591 = ssub.s32 16, 16
      %3592 = vsyncadd [#allocation4], %s3591
      %3595 = dma.smem_to_hbm [#allocation11], 16, %s8, [#allocation4]
    $region57: #{tpu_custom_call.1} parent=1 // pred_fallthru
      _
    // Predicated region
    $region58: #{tpu_custom_call.1} parent=1 // pred_check
      _
    $region59: #{tpu_custom_call.1} parent=1 // pred_check_branch
      %3597 = sbr.rel (0) target = $region61
    $region60: #{tpu_custom_call.1} parent=1 // pred_region
      %3598 = dma.done [#allocation4], 16
    $region61: #{tpu_custom_call.1} parent=1 // pred_fallthru
      _
    %3599 = sfence
    %3600 = vsyncpa [#allocation3], 1
    %3601 = vsyncpa [#allocation6], 1
    %3602 = vsyncpa [#allocation9], 1
    %3603 = vsyncpa [#allocation4], 1

</llo_original>
